<compile_context>
chip_gen: v7x
topology: tpu7x:2x2x1
jax: 0.10.0
libtpu: 0.0.40
codegen_flags: <defaults>
</compile_context>

<pallas_src>
import math

import jax
import jax.numpy as jnp
from jax import lax
from jax.experimental import pallas as pl
from jax.experimental.pallas import tpu as pltpu

D = 32                      # input_dim (fc_dim stand-in)
HEADS = 4
DH = D // HEADS             # attention_head_size
S = 8                       # sequence length per batch element
EPS = 1e-5                  # nn.LayerNorm default eps
DROPOUT_P = 0.1             # module arg; nn.Dropout is identity in eval mode
ROW_BUDGET = 64             # target token rows per grid step (review: 64-128)


def mha2_kernel(x_ref, wqkv_ref, w1t_ref, bqkv_ref, ln_ref,
                hd_ref, valid_ref, ones_ref, o_ref):
    """One grid step: BLOCK_B batch elements = NB = BLOCK_B*S token rows."""
    # ---- fused, pre-scaled QKV projection (weights packed once at init) -----
    qkv = jnp.dot(x_ref[...], wqkv_ref[...],
                  preferred_element_type=jnp.float32) + bqkv_ref[...]
    q = qkv[:, 0:D]            # 1/sqrt(DH) already folded into Wq / bq
    k = qkv[:, D:2 * D]
    v = qkv[:, 2 * D:3 * D]

    # ---- packed attention ----------------------------------------------------
    # K and V share one precomputed head-block-diagonal mask and one layout:
    # (HEADS*NB, D), row block h = head h.  No transpose of k.
    hd = hd_ref[...]                                    # (HB, D)
    k_big = jnp.concatenate([k] * HEADS, axis=0) * hd   # (HB, D)
    v_big = jnp.concatenate([v] * HEADS, axis=0) * hd   # (HB, D)

    # scores (NB, HB): column block h (width NB) holds head-h scores of every
    # query row against every key row of this batch chunk.
    scores = lax.dot_general(q, k_big, (((1,), (1,)), ((), ())),
                             preferred_element_type=jnp.float32)

    # Block-local softmax.  One shared row max is valid for every head block
    # (the common exp(-m) factor cancels in p); the precomputed `valid` mask
    # zeroes cross-batch key columns so the block-diagonal ones matmul yields
    # exactly the same-batch per-head denominators.
    valid = valid_ref[...]                              # (NB, HB) {0,1} f32
    m = jnp.max(scores, axis=-1, keepdims=True)
    e = jnp.exp(scores - m) * valid
    denom = jnp.dot(e, ones_ref[...], preferred_element_type=jnp.float32)
    denom = jnp.maximum(denom, 1e-30)                   # NaN guard (review note)
    p = e * pl.reciprocal(denom, approx=True)
    # attention_probs = dropout(1 - softmax); nn.Dropout is identity in eval.
    # Cross-batch columns must stay zero AFTER the (1 - p) step.
    # TODO(synk): training-mode dropout (random mask + 1/(1-p) scale) not applied.
    probs = (1.0 - p) * valid

    # Context matmul lands directly in (NB, D) head-concat layout.
    ctx = jnp.dot(probs, v_big, preferred_element_type=jnp.float32)

    # ---- dense1 + LayerNorm ---------------------------------------------------
    out = jnp.dot(ctx, w1t_ref[...],
                  preferred_element_type=jnp.float32) + ln_ref[0:1, :]
    mu = jnp.mean(out, axis=-1, keepdims=True)
    xc = out - mu
    var = jnp.mean(xc * xc, axis=-1, keepdims=True)
    y = xc * lax.rsqrt(var + EPS)
    o_ref[...] = y * ln_ref[1:2, :] + ln_ref[2:3, :]


def pack_params(params, block_b):
    """One-time packing: weight/bias slabs + structural masks (review items 1-3)."""
    wq, bq, wk, bk, wv, bv, w1, b1, gamma, beta = params
    s = 1.0 / math.sqrt(DH)                       # fold score scale into Wq / bq
    wqkv = jnp.concatenate([wq.T * s, wk.T, wv.T], axis=1)          # (D, 3D)
    bqkv = jnp.concatenate([bq * s, bk, bv])[None, :]               # (1, 3D)
    w1t = w1.T                                                      # (D, D)
    ln = jnp.stack([b1, gamma, beta], axis=0)                       # (3, D) rows

    nb = block_b * S
    hb = HEADS * nb
    row = jnp.arange(hb)[:, None]
    col = jnp.arange(D)[None, :]
    hd = ((row // nb) == (col // DH)).astype(jnp.float32)           # (HB, D)
    r = jnp.arange(nb)[:, None]
    c = jnp.arange(hb)[None, :]
    valid = ((r // S) == ((c // S) % block_b)).astype(jnp.float32)  # (NB, HB)
    a = jnp.arange(hb)[:, None]
    b = jnp.arange(hb)[None, :]
    ones_blk = ((a // nb) == (b // nb)).astype(jnp.float32)         # (HB, HB)

    return dict(wqkv=wqkv, w1t=w1t, bqkv=bqkv, ln=ln,
                hd=hd, valid=valid, ones=ones_blk, block_b=block_b)


def mha2_forward(x, packed):
    """x: (B, S, D) float32; packed: output of pack_params (built once)."""
    bsz = x.shape[0]
    block_b = packed["block_b"]
    nb = block_b * S
    hb = HEADS * nb
    g = pl.cdiv(bsz, block_b)
    bpad = g * block_b

    x2 = x.reshape(bsz * S, D)                  # free reshape in the wrapper
    if bpad != bsz:                             # pad to whole batch chunks
        x2 = jnp.concatenate(
            [x2, jnp.zeros(((bpad - bsz) * S, D), x2.dtype)], axis=0)

    const = lambda i: (0, 0)                    # resident weights / masks
    out2 = pl.pallas_call(
        mha2_kernel,
        out_shape=jax.ShapeDtypeStruct((bpad * S, D), jnp.float32),
        grid=(g,),
        in_specs=[
            pl.BlockSpec((nb, D), lambda i: (i, 0)),   # x: pipelined per step
            pl.BlockSpec((D, 3 * D), const),           # [Wq^T*s | Wk^T | Wv^T]
            pl.BlockSpec((D, D), const),               # W1^T
            pl.BlockSpec((1, 3 * D), const),           # [bq*s | bk | bv]
            pl.BlockSpec((3, D), const),               # rows: b1, gamma, beta
            pl.BlockSpec((hb, D), const),              # head-block-diag K/V mask
            pl.BlockSpec((nb, hb), const),             # same-batch mask
            pl.BlockSpec((hb, hb), const),             # block-diag ones (denoms)
        ],
        out_specs=pl.BlockSpec((nb, D), lambda i: (i, 0)),
        compiler_params=pltpu.CompilerParams(
            dimension_semantics=("parallel",)),        # shards on v7x's 2 TCs
    )(x2, packed["wqkv"], packed["w1t"], packed["bqkv"], packed["ln"],
      packed["hd"], packed["valid"], packed["ones"])
    return out2[: bsz * S].reshape(bsz, S, D)


def reference(x, params):
    """Pure-JAX mirror of the PyTorch MultiheadAttention2 forward (eval mode)."""
    bsz = x.shape[0]
    wq, bq, wk, bk, wv, bv, w1, b1, gamma, beta = params
    q = x @ wq.T + bq
    k = x @ wk.T + bk
    v = x @ wv.T + bv

    def heads(t):
        return t.reshape(bsz, S, HEADS, DH).transpose(0, 2, 1, 3)

    qh, kh, vh = heads(q), heads(k), heads(v)
    scores = jnp.einsum('bhqd,bhkd->bhqk', qh, kh) / math.sqrt(DH)
    probs = 1.0 - jax.nn.softmax(scores, axis=-1)
    ctx = jnp.einsum('bhqk,bhkd->bhqd', probs, vh)
    ctx = ctx.transpose(0, 2, 1, 3).reshape(bsz, S, D)
    out = ctx @ w1.T + b1
    mu = out.mean(-1, keepdims=True)
    var = ((out - mu) ** 2).mean(-1, keepdims=True)
    return (out - mu) / jnp.sqrt(var + EPS) * gamma + beta


def init_params(key):
    ks = jax.random.split(key, 10)
    bound = 1.0 / math.sqrt(D)   # PyTorch Linear default init range

    def lin(kw, kb):
        w = jax.random.uniform(kw, (D, D), jnp.float32, -bound, bound)
        b = jax.random.uniform(kb, (D,), jnp.float32, -bound, bound)
        return w, b

    wq, bq = lin(ks[0], ks[1])
    wk, bk = lin(ks[2], ks[3])
    wv, bv = lin(ks[4], ks[5])
    w1, b1 = lin(ks[6], ks[7])
    # LayerNorm defaults are gamma=1, beta=0; perturb slightly so the affine
    # path of the kernel is actually exercised by the correctness check.
    gamma = 1.0 + 0.05 * jax.random.normal(ks[8], (D,), jnp.float32)
    beta = 0.05 * jax.random.normal(ks[9], (D,), jnp.float32)
    return (wq, bq, wk, bk, wv, bv, w1, b1, gamma, beta)


if __name__ == "__main__":
    B = 16                                      # -> grid=(2,) at BLOCK_B = 8
    key = jax.random.PRNGKey(0)
    kx, kp = jax.random.split(key)
    x = jax.random.normal(kx, (B, S, D), jnp.float32)
    params = init_params(kp)

    block_b = max(1, min(B, ROW_BUDGET // S))   # 8 batches = 64 token rows/step
    packed = pack_params(params, block_b)       # one-time packing, NOT per call

    out = jax.block_until_ready(mha2_forward(x, packed))
    ref = reference(x, params)

    assert out.shape == (B, S, D)
    err = float(jnp.max(jnp.abs(out - ref)))
    # tolerance covers the EUP approx reciprocal plus fused-vs-split matmul rounding
    assert err < 3e-3, f"max abs err {err}"
    print("KERNEL_OK")
</pallas_src>

<mosaic_0001>
module attributes {stable_mosaic.version = 11 : i64} {
  func.func @mha2_kernel(%arg0: i32, %arg1: memref<64x32xf32, #tpu.memory_space<vmem>>, %arg2: memref<32x96xf32, #tpu.memory_space<vmem>>, %arg3: memref<32x32xf32, #tpu.memory_space<vmem>>, %arg4: memref<1x96xf32, #tpu.memory_space<vmem>>, %arg5: memref<3x32xf32, #tpu.memory_space<vmem>>, %arg6: memref<256x32xf32, #tpu.memory_space<vmem>>, %arg7: memref<64x256xf32, #tpu.memory_space<vmem>>, %arg8: memref<256x256xf32, #tpu.memory_space<vmem>>, %arg9: memref<64x32xf32, #tpu.memory_space<vmem>>) attributes {dimension_semantics = [#tpu.dimension_semantics<parallel>], iteration_bounds = array<i64: 2>, scalar_prefetch = 0 : i64, scratch_operands = 0 : i64, tpu.core_type = #tpu.core_type<tc>, window_params = [{transform_indices = @transform_0, window_bounds = array<i64: 64, 32>}, {pipeline_mode = #tpu.pipeline_mode<synchronous>, transform_indices = @transform_1, window_bounds = array<i64: 32, 96>}, {pipeline_mode = #tpu.pipeline_mode<synchronous>, transform_indices = @transform_2, window_bounds = array<i64: 32, 32>}, {pipeline_mode = #tpu.pipeline_mode<synchronous>, transform_indices = @transform_3, window_bounds = array<i64: 1, 96>}, {pipeline_mode = #tpu.pipeline_mode<synchronous>, transform_indices = @transform_4, window_bounds = array<i64: 3, 32>}, {pipeline_mode = #tpu.pipeline_mode<synchronous>, transform_indices = @transform_5, window_bounds = array<i64: 256, 32>}, {pipeline_mode = #tpu.pipeline_mode<synchronous>, transform_indices = @transform_6, window_bounds = array<i64: 64, 256>}, {pipeline_mode = #tpu.pipeline_mode<synchronous>, transform_indices = @transform_7, window_bounds = array<i64: 256, 256>}, {transform_indices = @transform_8, window_bounds = array<i64: 64, 32>}]} {
    %c0 = arith.constant 0 : index
    %c0_0 = arith.constant 0 : index
    %0 = vector.load %arg1[%c0, %c0_0] : memref<64x32xf32, #tpu.memory_space<vmem>>, vector<64x32xf32>
    %c0_1 = arith.constant 0 : index
    %c0_2 = arith.constant 0 : index
    %1 = vector.load %arg2[%c0_1, %c0_2] : memref<32x96xf32, #tpu.memory_space<vmem>>, vector<32x96xf32>
    %cst = arith.constant dense<0.000000e+00> : vector<64x96xf32>
    %2 = tpu.matmul %0, %1, %cst {dimension_numbers = #tpu.dot_dimension_numbers<[1], [0], [0], [1], [0, 0, 1, 1], [], []>} : vector<64x32xf32>, vector<32x96xf32>, vector<64x96xf32> -> vector<64x96xf32>
    %c0_3 = arith.constant 0 : index
    %c0_4 = arith.constant 0 : index
    %3 = vector.load %arg4[%c0_3, %c0_4] : memref<1x96xf32, #tpu.memory_space<vmem>>, vector<1x96xf32>
    %4 = vector.broadcast %3 : vector<1x96xf32> to vector<64x96xf32>
    %5 = arith.addf %2, %4 : vector<64x96xf32>
    %6 = vector.extract_strided_slice %5 {offsets = [0, 0], sizes = [64, 32], strides = [1, 1]} : vector<64x96xf32> to vector<64x32xf32>
    %7 = vector.extract_strided_slice %5 {offsets = [0, 32], sizes = [64, 32], strides = [1, 1]} : vector<64x96xf32> to vector<64x32xf32>
    %8 = vector.extract_strided_slice %5 {offsets = [0, 64], sizes = [64, 32], strides = [1, 1]} : vector<64x96xf32> to vector<64x32xf32>
    %c0_5 = arith.constant 0 : index
    %c0_6 = arith.constant 0 : index
    %9 = vector.load %arg6[%c0_5, %c0_6] : memref<256x32xf32, #tpu.memory_space<vmem>>, vector<256x32xf32>
    %10 = tpu.concatenate %7, %7, %7, %7 in 0 : vector<64x32xf32>, vector<64x32xf32>, vector<64x32xf32>, vector<64x32xf32> -> vector<256x32xf32>
    %11 = arith.mulf %10, %9 : vector<256x32xf32>
    %12 = tpu.concatenate %8, %8, %8, %8 in 0 : vector<64x32xf32>, vector<64x32xf32>, vector<64x32xf32>, vector<64x32xf32> -> vector<256x32xf32>
    %13 = arith.mulf %12, %9 : vector<256x32xf32>
    %cst_7 = arith.constant dense<0.000000e+00> : vector<64x256xf32>
    %14 = tpu.matmul %6, %11, %cst_7 {dimension_numbers = #tpu.dot_dimension_numbers<[1], [1], [0], [0], [0, 0, 1, 0], [], []>} : vector<64x32xf32>, vector<256x32xf32>, vector<64x256xf32> -> vector<64x256xf32>
    %c0_8 = arith.constant 0 : index
    %c0_9 = arith.constant 0 : index
    %15 = vector.load %arg7[%c0_8, %c0_9] : memref<64x256xf32, #tpu.memory_space<vmem>>, vector<64x256xf32>
    %cst_10 = arith.constant dense<0xFF800000> : vector<64xf32>
    %16 = vector.multi_reduction <maximumf>, %14, %cst_10 [1] : vector<64x256xf32> to vector<64xf32>
    %17 = vector.shape_cast %16 : vector<64xf32> to vector<64x1xf32>
    %18 = vector.broadcast %17 : vector<64x1xf32> to vector<64x256xf32>
    %19 = arith.subf %14, %18 : vector<64x256xf32>
    %20 = math.exp %19 : vector<64x256xf32>
    %21 = arith.mulf %20, %15 : vector<64x256xf32>
    %c0_11 = arith.constant 0 : index
    %c0_12 = arith.constant 0 : index
    %22 = vector.load %arg8[%c0_11, %c0_12] : memref<256x256xf32, #tpu.memory_space<vmem>>, vector<256x256xf32>
    %cst_13 = arith.constant dense<0.000000e+00> : vector<64x256xf32>
    %23 = tpu.matmul %21, %22, %cst_13 {dimension_numbers = #tpu.dot_dimension_numbers<[1], [0], [0], [1], [0, 0, 1, 1], [], []>} : vector<64x256xf32>, vector<256x256xf32>, vector<64x256xf32> -> vector<64x256xf32>
    %cst_14 = arith.constant 1.000000e-30 : f32
    %24 = vector.broadcast %cst_14 : f32 to vector<64x256xf32>
    %25 = arith.maximumf %23, %24 : vector<64x256xf32>
    %26 = tpu.reciprocal %25 {approx = true} : vector<64x256xf32> -> vector<64x256xf32>
    %27 = arith.mulf %21, %26 : vector<64x256xf32>
    %cst_15 = arith.constant 1.000000e+00 : f32
    %28 = vector.broadcast %cst_15 : f32 to vector<64x256xf32>
    %29 = arith.subf %28, %27 : vector<64x256xf32>
    %30 = arith.mulf %29, %15 : vector<64x256xf32>
    %cst_16 = arith.constant dense<0.000000e+00> : vector<64x32xf32>
    %31 = tpu.matmul %30, %13, %cst_16 {dimension_numbers = #tpu.dot_dimension_numbers<[1], [0], [0], [1], [0, 0, 1, 1], [], []>} : vector<64x256xf32>, vector<256x32xf32>, vector<64x32xf32> -> vector<64x32xf32>
    %c0_17 = arith.constant 0 : index
    %c0_18 = arith.constant 0 : index
    %32 = vector.load %arg3[%c0_17, %c0_18] : memref<32x32xf32, #tpu.memory_space<vmem>>, vector<32x32xf32>
    %cst_19 = arith.constant dense<0.000000e+00> : vector<64x32xf32>
    %33 = tpu.matmul %31, %32, %cst_19 {dimension_numbers = #tpu.dot_dimension_numbers<[1], [0], [0], [1], [0, 0, 1, 1], [], []>} : vector<64x32xf32>, vector<32x32xf32>, vector<64x32xf32> -> vector<64x32xf32>
    %c0_20 = arith.constant 0 : index
    %c0_21 = arith.constant 0 : index
    %34 = vector.load %arg5[%c0_20, %c0_21] : memref<3x32xf32, #tpu.memory_space<vmem>>, vector<1x32xf32>
    %35 = vector.broadcast %34 : vector<1x32xf32> to vector<64x32xf32>
    %36 = arith.addf %33, %35 : vector<64x32xf32>
    %cst_22 = arith.constant dense<0.000000e+00> : vector<64xf32>
    %37 = vector.multi_reduction <add>, %36, %cst_22 [1] : vector<64x32xf32> to vector<64xf32>
    %38 = vector.shape_cast %37 : vector<64xf32> to vector<64x1xf32>
    %cst_23 = arith.constant 3.200000e+01 : f32
    %39 = vector.broadcast %cst_23 : f32 to vector<64x1xf32>
    %40 = arith.divf %38, %39 : vector<64x1xf32>
    %41 = vector.broadcast %40 : vector<64x1xf32> to vector<64x32xf32>
    %42 = arith.subf %36, %41 : vector<64x32xf32>
    %43 = arith.mulf %42, %42 : vector<64x32xf32>
    %cst_24 = arith.constant dense<0.000000e+00> : vector<64xf32>
    %44 = vector.multi_reduction <add>, %43, %cst_24 [1] : vector<64x32xf32> to vector<64xf32>
    %45 = vector.shape_cast %44 : vector<64xf32> to vector<64x1xf32>
    %cst_25 = arith.constant 3.200000e+01 : f32
    %46 = vector.broadcast %cst_25 : f32 to vector<64x1xf32>
    %47 = arith.divf %45, %46 : vector<64x1xf32>
    %cst_26 = arith.constant 9.99999974E-6 : f32
    %48 = vector.broadcast %cst_26 : f32 to vector<64x1xf32>
    %49 = arith.addf %47, %48 : vector<64x1xf32>
    %50 = math.rsqrt %49 : vector<64x1xf32>
    %51 = vector.broadcast %50 : vector<64x1xf32> to vector<64x32xf32>
    %52 = arith.mulf %42, %51 : vector<64x32xf32>
    %c1 = arith.constant 1 : index
    %c0_27 = arith.constant 0 : index
    %53 = vector.load %arg5[%c1, %c0_27] : memref<3x32xf32, #tpu.memory_space<vmem>>, vector<1x32xf32>
    %54 = vector.broadcast %53 : vector<1x32xf32> to vector<64x32xf32>
    %55 = arith.mulf %52, %54 : vector<64x32xf32>
    %c2 = arith.constant 2 : index
    %c0_28 = arith.constant 0 : index
    %56 = vector.load %arg5[%c2, %c0_28] : memref<3x32xf32, #tpu.memory_space<vmem>>, vector<1x32xf32>
    %57 = vector.broadcast %56 : vector<1x32xf32> to vector<64x32xf32>
    %58 = arith.addf %55, %57 : vector<64x32xf32>
    %c0_29 = arith.constant 0 : index
    %c0_30 = arith.constant 0 : index
    %59 = vector.load %arg9[%c0_29, %c0_30] : memref<64x32xf32, #tpu.memory_space<vmem>>, vector<64x32xf32>
    tpu.vector_store %arg9[%c0_29, %c0_30], %58 {strides = array<i32>} : memref<64x32xf32, #tpu.memory_space<vmem>>, vector<64x32xf32>,
    return
  }
  func.func @transform_0(%arg0: i32) -> (i32, i32) {
    %c0_i32 = arith.constant 0 : i32
    %c0_i32_0 = arith.constant 0 : i32
    return %arg0, %c0_i32 : i32, i32
  }
  func.func @transform_1(%arg0: i32) -> (i32, i32) {
    %c0_i32 = arith.constant 0 : i32
    %c0_i32_0 = arith.constant 0 : i32
    %c0_i32_1 = arith.constant 0 : i32
    return %c0_i32, %c0_i32_0 : i32, i32
  }
  func.func @transform_2(%arg0: i32) -> (i32, i32) {
    %c0_i32 = arith.constant 0 : i32
    %c0_i32_0 = arith.constant 0 : i32
    %c0_i32_1 = arith.constant 0 : i32
    return %c0_i32, %c0_i32_0 : i32, i32
  }
  func.func @transform_3(%arg0: i32) -> (i32, i32) {
    %c0_i32 = arith.constant 0 : i32
    %c0_i32_0 = arith.constant 0 : i32
    %c0_i32_1 = arith.constant 0 : i32
    return %c0_i32, %c0_i32_0 : i32, i32
  }
  func.func @transform_4(%arg0: i32) -> (i32, i32) {
    %c0_i32 = arith.constant 0 : i32
    %c0_i32_0 = arith.constant 0 : i32
    %c0_i32_1 = arith.constant 0 : i32
    return %c0_i32, %c0_i32_0 : i32, i32
  }
  func.func @transform_5(%arg0: i32) -> (i32, i32) {
    %c0_i32 = arith.constant 0 : i32
    %c0_i32_0 = arith.constant 0 : i32
    %c0_i32_1 = arith.constant 0 : i32
    return %c0_i32, %c0_i32_0 : i32, i32
  }
  func.func @transform_6(%arg0: i32) -> (i32, i32) {
    %c0_i32 = arith.constant 0 : i32
    %c0_i32_0 = arith.constant 0 : i32
    %c0_i32_1 = arith.constant 0 : i32
    return %c0_i32, %c0_i32_0 : i32, i32
  }
  func.func @transform_7(%arg0: i32) -> (i32, i32) {
    %c0_i32 = arith.constant 0 : i32
    %c0_i32_0 = arith.constant 0 : i32
    %c0_i32_1 = arith.constant 0 : i32
    return %c0_i32, %c0_i32_0 : i32, i32
  }
  func.func @transform_8(%arg0: i32) -> (i32, i32) {
    %c0_i32 = arith.constant 0 : i32
    %c0_i32_0 = arith.constant 0 : i32
    return %arg0, %c0_i32 : i32, i32
  }
}

</mosaic_0001>

<llo_original>
// kernel: tpu_custom_call.1
$region0: #{tpu_custom_call.1}
  #allocation0 [shape = 'u32[]', space=smem, size = 0x4, offset = 0x4, fixed_abs, tag = 'smem constant byte address 0x4 - core index']
  #allocation1 [shape = 'u32[144,128]{1,0:T(1,128)}', space=vmem, size = 0x12000, scoped, tag = 'internal scratch']
  %s0 = inlined_call_operand.vmem [shape: f32[128,32], index: 0, kind: input, shape index: {}]
  %s1 = inlined_call_operand.vmem [shape: f32[32,96], index: 1, kind: input, shape index: {}]
  %s2 = inlined_call_operand.vmem [shape: f32[32,32], index: 2, kind: input, shape index: {}]
  %s3 = inlined_call_operand.vmem [shape: f32[1,96], index: 3, kind: input, shape index: {}]
  %s4 = inlined_call_operand.vmem [shape: f32[3,32], index: 4, kind: input, shape index: {}]
  %s5 = inlined_call_operand.vmem [shape: f32[256,32], index: 5, kind: input, shape index: {}]
  %s6 = inlined_call_operand.vmem [shape: f32[64,256], index: 6, kind: input, shape index: {}]
  %s7 = inlined_call_operand.hbm [shape: f32[256,256], index: 7, kind: input, shape index: {}]
  %s8 = inlined_call_operand.vmem [shape: f32[128,32], index: 8, kind: output, shape index: {}]
  %s9 = sld [smem:[#allocation0]]
  $region69: #{tpu_custom_call.1} parent=0
    _
  %s11 = ssub.s32 1, %s9
  %s12 = scalar_select 0, %s11, %s9
  $region1: #{tpu_custom_call.1} parent=0
    #allocation2 [shape = 'u8[262144]{0}', space=vmem, size = 0x40000, scoped, tag = 'input window, operand 7, single buffered']
    #allocation3 [shape = 's32[2]{0}', space=sflag, size = 0x8, scoped, tag = 'scoped memory for tpu_custom_call.1']
    %13 = vsyncpa [#allocation3], 0
    loop: start=0, step=1, limit=4
    $region2: #{tpu_custom_call.1} parent=1 // loop_pre_header
      _
    $region3: #{tpu_custom_call.1} parent=1 // loop_header
      %s15 = sphi 0, %s19
      %p16 = scmp.ge.s32.totalorder %s15, 4
      %s25 = sphi 0, %s27
      %s28 = sphi 0, %s25
      %s29 = sphi 0, %s28
      %s45 = sphi 0, %s29
      %s49 = sphi 0, %s49
      %s51 = sphi 0, %s49
      %s52 = sphi 0, %s51
      %s66 = sphi 0, %s52
      %s70 = sphi 0, %s70
      %s72 = sphi 0, %s70
      %s73 = sphi 0, %s72
      %s87 = sphi 0, %s73
      %s91 = sphi 0, %s91
      %s93 = sphi 0, %s91
      %s94 = sphi 0, %s93
      %s108 = sphi 0, %s94
      %s112 = sphi 0, %s112
      %s114 = sphi 0, %s112
      %s115 = sphi 0, %s114
      %s129 = sphi 0, %s115
      %s133 = sphi 0, %s133
      %s135 = sphi 0, %s133
      %s136 = sphi 0, %s135
      %s150 = sphi 0, %s136
      %s154 = sphi 0, %s154
      %s156 = sphi 0, %s154
      %s157 = sphi 0, %s156
      %s171 = sphi 0, %s157
      %s175 = sphi 0, %s175
      %s177 = sphi 0, %s175
      %s178 = sphi 0, %s177
      %s192 = sphi 0, %s178
      %s198 = sphi 0, %s200
      %s201 = sphi 0, %s198
      %s202 = sphi 0, %s201
      %s218 = sphi 0, %s202
    $region4: #{tpu_custom_call.1} parent=1 // loop_header_branch
      %18 = sbr.rel (%p16) target = $region8
    $region5: #{tpu_custom_call.1} parent=1 // loop_body
      %s20 = ssub.s32 %s15, 1
      %s21 = ssub.s32 %s15, 2
      %s22 = sadd.s32 %s15, 1
      %s23 = ssub.s32 %s15, %s22
      %p24 = scmp.eq.s32.totalorder %s23, 0
      %s26 = sadd.s32 %s25, 1
      %s27 = scalar_select %p24, %s25, %s26
      %p30 = pneg %p24
      %p31 = scmp.eq.s32.totalorder %s15, 1
      %p32 = por %p30, %p31
      %p33 = scmp.ne.s32.totalorder %s25, %s28
      %p34 = scmp.eq.s32.totalorder %s15, 0
      %p35 = por %p33, %p34
      %p36 = scmp.ne.s32.totalorder %s25, %s28
      %p37 = scmp.eq.s32.totalorder %s20, 1
      %p38 = por %p36, %p37
      %p39 = scmp.ne.s32.totalorder %s28, %s29
      %p40 = scmp.eq.s32.totalorder %s20, 0
      %p41 = por %p39, %p40
      %p42 = scmp.ne.s32.totalorder %s28, %s29
      %p43 = scmp.eq.s32.totalorder %s21, 1
      %p44 = por %p42, %p43
      %p46 = scmp.ne.s32.totalorder %s29, %s45
      %p47 = scmp.eq.s32.totalorder %s21, 0
      %p48 = por %p46, %p47
      %s50 = sadd.s32 %s49, 1
      %p53 = scmp.eq.s32.totalorder %s15, 1
      %p54 = scmp.ne.s32.totalorder %s49, %s51
      %p55 = scmp.eq.s32.totalorder %s15, 0
      %p56 = por %p54, %p55
      %p57 = scmp.ne.s32.totalorder %s49, %s51
      %p58 = scmp.eq.s32.totalorder %s20, 1
      %p59 = por %p57, %p58
      %p60 = scmp.ne.s32.totalorder %s51, %s52
      %p61 = scmp.eq.s32.totalorder %s20, 0
      %p62 = por %p60, %p61
      %p63 = scmp.ne.s32.totalorder %s51, %s52
      %p64 = scmp.eq.s32.totalorder %s21, 1
      %p65 = por %p63, %p64
      %p67 = scmp.ne.s32.totalorder %s52, %s66
      %p68 = scmp.eq.s32.totalorder %s21, 0
      %p69 = por %p67, %p68
      %s71 = sadd.s32 %s70, 1
      %p74 = scmp.eq.s32.totalorder %s15, 1
      %p75 = scmp.ne.s32.totalorder %s70, %s72
      %p76 = scmp.eq.s32.totalorder %s15, 0
      %p77 = por %p75, %p76
      %p78 = scmp.ne.s32.totalorder %s70, %s72
      %p79 = scmp.eq.s32.totalorder %s20, 1
      %p80 = por %p78, %p79
      %p81 = scmp.ne.s32.totalorder %s72, %s73
      %p82 = scmp.eq.s32.totalorder %s20, 0
      %p83 = por %p81, %p82
      %p84 = scmp.ne.s32.totalorder %s72, %s73
      %p85 = scmp.eq.s32.totalorder %s21, 1
      %p86 = por %p84, %p85
      %p88 = scmp.ne.s32.totalorder %s73, %s87
      %p89 = scmp.eq.s32.totalorder %s21, 0
      %p90 = por %p88, %p89
      %s92 = sadd.s32 %s91, 1
      %p95 = scmp.eq.s32.totalorder %s15, 1
      %p96 = scmp.ne.s32.totalorder %s91, %s93
      %p97 = scmp.eq.s32.totalorder %s15, 0
      %p98 = por %p96, %p97
      %p99 = scmp.ne.s32.totalorder %s91, %s93
      %p100 = scmp.eq.s32.totalorder %s20, 1
      %p101 = por %p99, %p100
      %p102 = scmp.ne.s32.totalorder %s93, %s94
      %p103 = scmp.eq.s32.totalorder %s20, 0
      %p104 = por %p102, %p103
      %p105 = scmp.ne.s32.totalorder %s93, %s94
      %p106 = scmp.eq.s32.totalorder %s21, 1
      %p107 = por %p105, %p106
      %p109 = scmp.ne.s32.totalorder %s94, %s108
      %p110 = scmp.eq.s32.totalorder %s21, 0
      %p111 = por %p109, %p110
      %s113 = sadd.s32 %s112, 1
      %p116 = scmp.eq.s32.totalorder %s15, 1
      %p117 = scmp.ne.s32.totalorder %s112, %s114
      %p118 = scmp.eq.s32.totalorder %s15, 0
      %p119 = por %p117, %p118
      %p120 = scmp.ne.s32.totalorder %s112, %s114
      %p121 = scmp.eq.s32.totalorder %s20, 1
      %p122 = por %p120, %p121
      %p123 = scmp.ne.s32.totalorder %s114, %s115
      %p124 = scmp.eq.s32.totalorder %s20, 0
      %p125 = por %p123, %p124
      %p126 = scmp.ne.s32.totalorder %s114, %s115
      %p127 = scmp.eq.s32.totalorder %s21, 1
      %p128 = por %p126, %p127
      %p130 = scmp.ne.s32.totalorder %s115, %s129
      %p131 = scmp.eq.s32.totalorder %s21, 0
      %p132 = por %p130, %p131
      %s134 = sadd.s32 %s133, 1
      %p137 = scmp.eq.s32.totalorder %s15, 1
      %p138 = scmp.ne.s32.totalorder %s133, %s135
      %p139 = scmp.eq.s32.totalorder %s15, 0
      %p140 = por %p138, %p139
      %p141 = scmp.ne.s32.totalorder %s133, %s135
      %p142 = scmp.eq.s32.totalorder %s20, 1
      %p143 = por %p141, %p142
      %p144 = scmp.ne.s32.totalorder %s135, %s136
      %p145 = scmp.eq.s32.totalorder %s20, 0
      %p146 = por %p144, %p145
      %p147 = scmp.ne.s32.totalorder %s135, %s136
      %p148 = scmp.eq.s32.totalorder %s21, 1
      %p149 = por %p147, %p148
      %p151 = scmp.ne.s32.totalorder %s136, %s150
      %p152 = scmp.eq.s32.totalorder %s21, 0
      %p153 = por %p151, %p152
      %s155 = sadd.s32 %s154, 1
      %p158 = scmp.eq.s32.totalorder %s15, 1
      %p159 = scmp.ne.s32.totalorder %s154, %s156
      %p160 = scmp.eq.s32.totalorder %s15, 0
      %p161 = por %p159, %p160
      %p162 = scmp.ne.s32.totalorder %s154, %s156
      %p163 = scmp.eq.s32.totalorder %s20, 1
      %p164 = por %p162, %p163
      %p165 = scmp.ne.s32.totalorder %s156, %s157
      %p166 = scmp.eq.s32.totalorder %s20, 0
      %p167 = por %p165, %p166
      %p168 = scmp.ne.s32.totalorder %s156, %s157
      %p169 = scmp.eq.s32.totalorder %s21, 1
      %p170 = por %p168, %p169
      %p172 = scmp.ne.s32.totalorder %s157, %s171
      %p173 = scmp.eq.s32.totalorder %s21, 0
      %p174 = por %p172, %p173
      %s176 = sadd.s32 %s175, 1
      %p179 = scmp.eq.s32.totalorder %s15, 1
      %p180 = scmp.ne.s32.totalorder %s175, %s177
      %p181 = scmp.eq.s32.totalorder %s15, 0
      %p182 = por %p180, %p181
      %p183 = scmp.ne.s32.totalorder %s175, %s177
      %p184 = scmp.eq.s32.totalorder %s20, 1
      %p185 = por %p183, %p184
      %p186 = scmp.ne.s32.totalorder %s177, %s178
      %p187 = scmp.eq.s32.totalorder %s20, 0
      %p188 = por %p186, %p187
      %p189 = scmp.ne.s32.totalorder %s177, %s178
      %p190 = scmp.eq.s32.totalorder %s21, 1
      %p191 = por %p189, %p190
      %p193 = scmp.ne.s32.totalorder %s178, %s192
      %p194 = scmp.eq.s32.totalorder %s21, 0
      %p195 = por %p193, %p194
      %s196 = ssub.s32 %s15, %s22
      %p197 = scmp.eq.s32.totalorder %s196, 0
      %s199 = sadd.s32 %s198, 1
      %s200 = scalar_select %p197, %s198, %s199
      %p203 = pneg %p197
      %p204 = scmp.eq.s32.totalorder %s15, 1
      %p205 = por %p203, %p204
      %p206 = scmp.ne.s32.totalorder %s198, %s201
      %p207 = scmp.eq.s32.totalorder %s15, 0
      %p208 = por %p206, %p207
      %p209 = scmp.ne.s32.totalorder %s198, %s201
      %p210 = scmp.eq.s32.totalorder %s20, 1
      %p211 = por %p209, %p210
      %p212 = scmp.ne.s32.totalorder %s201, %s202
      %p213 = scmp.eq.s32.totalorder %s20, 0
      %p214 = por %p212, %p213
      %p215 = scmp.ne.s32.totalorder %s201, %s202
      %p216 = scmp.eq.s32.totalorder %s21, 1
      %p217 = por %p215, %p216
      %p219 = scmp.ne.s32.totalorder %s202, %s218
      %p220 = scmp.eq.s32.totalorder %s21, 0
      %p221 = por %p219, %p220
      %p222 = scmp.le.s32.totalorder 1, %s15
      %p223 = scmp.lt.s32.totalorder %s15, 3
      %p224 = pnand %p222, %p223
      %p225 = pneg %p224
      // Predicated region
      $region9: #{tpu_custom_call.1} parent=5 // pred_check
        _
      $region10: #{tpu_custom_call.1} parent=5 // pred_check_branch
        %227 = sbr.rel (%p224) target = $region12
      $region11: #{tpu_custom_call.1} parent=5 // pred_region
        %s228 = ssub.s32 %s15, 1
        // Predicated region
        $region13: #{tpu_custom_call.1} parent=11 // pred_check
          %p229 = pneg %p62
        $region14: #{tpu_custom_call.1} parent=11 // pred_check_branch
          %231 = sbr.rel (%p229) target = $region16
        $region15: #{tpu_custom_call.1} parent=11 // pred_region
          _
        $region16: #{tpu_custom_call.1} parent=11 // pred_fallthru
          _
        // Predicated region
        $region17: #{tpu_custom_call.1} parent=11 // pred_check
          %p232 = pneg %p83
        $region18: #{tpu_custom_call.1} parent=11 // pred_check_branch
          %234 = sbr.rel (%p232) target = $region20
        $region19: #{tpu_custom_call.1} parent=11 // pred_region
          _
        $region20: #{tpu_custom_call.1} parent=11 // pred_fallthru
          _
        // Predicated region
        $region21: #{tpu_custom_call.1} parent=11 // pred_check
          %p235 = pneg %p104
        $region22: #{tpu_custom_call.1} parent=11 // pred_check_branch
          %237 = sbr.rel (%p235) target = $region24
        $region23: #{tpu_custom_call.1} parent=11 // pred_region
          _
        $region24: #{tpu_custom_call.1} parent=11 // pred_fallthru
          _
        // Predicated region
        $region25: #{tpu_custom_call.1} parent=11 // pred_check
          %p238 = pneg %p125
        $region26: #{tpu_custom_call.1} parent=11 // pred_check_branch
          %240 = sbr.rel (%p238) target = $region28
        $region27: #{tpu_custom_call.1} parent=11 // pred_region
          _
        $region28: #{tpu_custom_call.1} parent=11 // pred_fallthru
          _
        // Predicated region
        $region29: #{tpu_custom_call.1} parent=11 // pred_check
          %p241 = pneg %p146
        $region30: #{tpu_custom_call.1} parent=11 // pred_check_branch
          %243 = sbr.rel (%p241) target = $region32
        $region31: #{tpu_custom_call.1} parent=11 // pred_region
          _
        $region32: #{tpu_custom_call.1} parent=11 // pred_fallthru
          _
        // Predicated region
        $region33: #{tpu_custom_call.1} parent=11 // pred_check
          %p244 = pneg %p167
        $region34: #{tpu_custom_call.1} parent=11 // pred_check_branch
          %246 = sbr.rel (%p244) target = $region36
        $region35: #{tpu_custom_call.1} parent=11 // pred_region
          _
        $region36: #{tpu_custom_call.1} parent=11 // pred_fallthru
          _
        // Predicated region
        $region37: #{tpu_custom_call.1} parent=11 // pred_check
          %p247 = pneg %p188
        $region38: #{tpu_custom_call.1} parent=11 // pred_check_branch
          %249 = sbr.rel (%p247) target = $region40
        $region39: #{tpu_custom_call.1} parent=11 // pred_region
          %s251 = ssub.s32 8192, 8192
          %252 = vsyncadd [#allocation3], %s251
          %s253 = sshll.u32 [#allocation2], 4
          %s254 = int_to_ptr.vmem [resolvable:$true] %s253
          %259 = dma.hbm_to_vmem [thread:$0]  %s7, 8192, %s254, [#allocation3], 256, 256, 16
        $region40: #{tpu_custom_call.1} parent=11 // pred_fallthru
          _
      $region12: #{tpu_custom_call.1} parent=5 // pred_fallthru
        _
      %p260 = scmp.lt.s32.totalorder %s15, 2
      // Predicated region
      $region41: #{tpu_custom_call.1} parent=5 // pred_check
        %p261 = pneg %p260
      $region42: #{tpu_custom_call.1} parent=5 // pred_check_branch
        %263 = sbr.rel (%p261) target = $region44
      $region43: #{tpu_custom_call.1} parent=5 // pred_region
        // Predicated region
        $region45: #{tpu_custom_call.1} parent=43 // pred_check
          %p264 = pneg %p35
        $region46: #{tpu_custom_call.1} parent=43 // pred_check_branch
          %266 = sbr.rel (%p264) target = $region48
        $region47: #{tpu_custom_call.1} parent=43 // pred_region
          %s267 = smul.u32 8, %s15
          %p268 = scmp.lt.s32.totalorder %s267, 15
          %s269 = scalar_select %p268, %s267, 15
          %s270 = smul.addr %s269, 8
          %s271 = scalar_lea.vmem %s0, %s270
          %s272 = smul.u32 8, %s15
        $region48: #{tpu_custom_call.1} parent=43 // pred_fallthru
          _
      $region44: #{tpu_custom_call.1} parent=5 // pred_fallthru
        _
      %p273 = scmp.le.s32.totalorder 1, %s15
      %p274 = scmp.lt.s32.totalorder %s15, 3
      %p275 = pnand %p273, %p274
      %p276 = pneg %p275
      // Predicated region
      $region49: #{tpu_custom_call.1} parent=5 // pred_check
        _
      $region50: #{tpu_custom_call.1} parent=5 // pred_check_branch
        %278 = sbr.rel (%p275) target = $region52
      $region51: #{tpu_custom_call.1} parent=5 // pred_region
        %s279 = ssub.s32 %s15, 1
        // Predicated region
        $region53: #{tpu_custom_call.1} parent=51 // pred_check
          %p280 = pneg %p188
        $region54: #{tpu_custom_call.1} parent=51 // pred_check_branch
          %282 = sbr.rel (%p280) target = $region56
        $region55: #{tpu_custom_call.1} parent=51 // pred_region
          %283 = dma.done [#allocation3], 8192
        $region56: #{tpu_custom_call.1} parent=51 // pred_fallthru
          _
        %s284 = smul.u32 8, %s20
        %p285 = scmp.lt.s32.totalorder %s284, 15
        %s286 = scalar_select %p285, %s284, 15
        %s287 = smul.addr %s286, 8
        %s288 = scalar_lea.vmem %s0, %s287
        %p289 = pneg %p41
        %p290 = pneg %p38
        %p291 = pneg %p62
        %p292 = pneg %p59
        %p293 = pneg %p83
        %p294 = pneg %p80
        %p295 = pneg %p104
        %p296 = pneg %p101
        %p297 = pneg %p125
        %p298 = pneg %p122
        %p299 = pneg %p146
        %p300 = pneg %p143
        %p301 = pneg %p167
        %p302 = pneg %p164
        %p303 = pneg %p188
        %p304 = pneg %p185
        %p305 = pneg %p214
        %p306 = pneg %p211
        %s307 = smul.u32 8, %s20
        %p308 = scmp.lt.s32.totalorder %s307, 15
        %s309 = scalar_select %p308, %s307, 15
        %s310 = smul.addr %s309, 8
        %s311 = scalar_lea.vmem %s8, %s310
        %s312 = smul.u32 8, %s20
        %p313 = scmp.lt.s32.totalorder %s312, 15
        %s314 = scalar_select %p313, %s312, 15
        %s315 = smul.addr %s314, 8
        %s316 = scalar_lea.vmem %s0, %s315
        %s317 = smul.u32 8, %s20
        %s318 = smul.u32 8, %s20
        %p319 = scmp.lt.s32.totalorder %s318, 15
        %s320 = scalar_select %p319, %s318, 15
        %s321 = smul.addr %s320, 8
        %s322 = scalar_lea.vmem %s8, %s321
        %s323 = smul.u32 8, %s20
        %v324 = vld [vmem:[%s316] sm:$0xff]
        %v325 = vld [vmem:[%s316 + $0x8] sm:$0xff]
        %v326 = vld [vmem:[%s316 + $0x10] sm:$0xff]
        %v327 = vld [vmem:[%s316 + $0x18] sm:$0xff]
        %v328 = vld [vmem:[%s316 + $0x20] sm:$0xff]
        %v329 = vld [vmem:[%s316 + $0x28] sm:$0xff]
        %v330 = vld [vmem:[%s316 + $0x30] sm:$0xff]
        %v331 = vld [vmem:[%s316 + $0x38] sm:$0xff]
        %v332 = vld [vmem:[%s1] sm:$0xff]
        %v333 = vld [vmem:[%s1 + $0x8] sm:$0xff]
        %v334 = vld [vmem:[%s1 + $0x10] sm:$0xff]
        %v335 = vld [vmem:[%s1 + $0x18] sm:$0xff]
        %v336 = vld [vmem:[%s3] sm:$0x1]
        %v338 = vlaneseq
        %v339 = vshrl.u32 %v338, 7
        %v340 = vsub.s32 0, %v339
        %v341 = vrot.slane %v336, %v340
        %vm343 = vcmask 261120
        %v345 = vsel %vm343, %v324, 0
        %v348 = vsel %vm343, %v325, 0
        %v351 = vsel %vm343, %v326, 0
        %v354 = vsel %vm343, %v327, 0
        %v357 = vsel %vm343, %v328, 0
        %v360 = vsel %vm343, %v329, 0
        %v363 = vsel %vm343, %v330, 0
        %v366 = vsel %vm343, %v331, 0
        %368 = vmatprep.subr.mxu0 0.0
        %369 = vmatpush1.msra.mxu0 %v332
        %370 = vmatprep.subr.mxu0 0.0
        %371 = vmatpush1.msra.mxu0 %v333
        %372 = vmatprep.subr.mxu0 0.0
        %373 = vmatpush1.msra.mxu0 %v334
        %374 = vmatprep.subr.mxu0 0.0
        %375 = vmatpush1.msra.mxu0 %v335
        %376 = vmatprep.subr.mxu0 0.0
        %377 = vmatpush1.msra.mxu0 0.0
        %378 = vmatprep.subr.mxu0 0.0
        %379 = vmatpush1.msra.mxu0 0.0
        %380 = vmatprep.subr.mxu0 0.0
        %381 = vmatpush1.msra.mxu0 0.0
        %382 = vmatprep.subr.mxu0 0.0
        %383 = vmatpush1.msra.mxu0 0.0
        %384 = vmatprep.subr.mxu0 0.0
        %385 = vmatpush1.msra.mxu0 0.0
        %386 = vmatprep.subr.mxu0 0.0
        %387 = vmatpush1.msra.mxu0 0.0
        %388 = vmatprep.subr.mxu0 0.0
        %389 = vmatpush1.msra.mxu0 0.0
        %390 = vmatprep.subr.mxu0 0.0
        %391 = vmatpush1.msra.mxu0 0.0
        %392 = vmatprep.subr.mxu0 0.0
        %393 = vmatpush1.msra.mxu0 0.0
        %394 = vmatprep.subr.mxu0 0.0
        %395 = vmatpush1.msra.mxu0 0.0
        %396 = vmatprep.subr.mxu0 0.0
        %397 = vmatpush1.msra.mxu0 0.0
        %398 = vmatprep.subr.mxu0 0.0
        %399 = vmatpush1.msra.mxu0 0.0
        %400 = vmatprep.subr.mxu0 0.0
        %401 = vmatpush1.msra.mxu0 0.0
        %402 = vmatprep.subr.mxu0 0.0
        %403 = vmatpush1.msra.mxu0 0.0
        %404 = vmatprep.subr.mxu0 0.0
        %405 = vmatpush1.msra.mxu0 0.0
        %406 = vmatprep.subr.mxu0 0.0
        %407 = vmatpush1.msra.mxu0 0.0
        %408 = vmatprep.subr.mxu0 0.0
        %409 = vmatpush1.msra.mxu0 0.0
        %410 = vmatprep.subr.mxu0 0.0
        %411 = vmatpush1.msra.mxu0 0.0
        %412 = vmatprep.subr.mxu0 0.0
        %413 = vmatpush1.msra.mxu0 0.0
        %414 = vmatprep.subr.mxu0 0.0
        %415 = vmatpush1.msra.mxu0 0.0
        %416 = vmatprep.subr.mxu0 0.0
        %417 = vmatpush1.msra.mxu0 0.0
        %418 = vmatprep.subr.mxu0 0.0
        %419 = vmatpush1.msra.mxu0 0.0
        %420 = vmatprep.subr.mxu0 0.0
        %421 = vmatpush1.msra.mxu0 0.0
        %422 = vmatprep.subr.mxu0 0.0
        %423 = vmatpush1.msra.mxu0 0.0
        %424 = vmatprep.subr.mxu0 0.0
        %425 = vmatpush1.msra.mxu0 0.0
        %426 = vmatprep.subr.mxu0 0.0
        %427 = vmatpush1.msra.mxu0 0.0
        %428 = vmatprep.subr.mxu0 0.0
        %429 = vmatpush1.msra.mxu0 0.0
        %430 = vmatprep.subr.mxu0 0.0
        %431 = vmatpush1.msra.mxu0 0.0
        %432 = vmatprep.mubr.f32.mxu0 0.0
        %433 = vmatmul.mubr.f32.gmra.mrb[0].mxu0 %v345
        %v434 = vpop.f32.mrb[0].mxu0
        %v435 = vadd.f32 %v341, %v434
        %v436 = vpop.f32.mrb[0].mxu0
        %437 = vmatprep.mubr.f32.mxu0 0.0
        %438 = vmatmul.mubr.f32.gmra.mrb[0].mxu0 %v348
        %v439 = vpop.f32.mrb[0].mxu0
        %v440 = vadd.f32 %v341, %v439
        %v441 = vpop.f32.mrb[0].mxu0
        %442 = vmatprep.mubr.f32.mxu0 0.0
        %443 = vmatmul.mubr.f32.gmra.mrb[0].mxu0 %v351
        %v444 = vpop.f32.mrb[0].mxu0
        %v445 = vadd.f32 %v341, %v444
        %v446 = vpop.f32.mrb[0].mxu0
        %447 = vmatprep.mubr.f32.mxu0 0.0
        %448 = vmatmul.mubr.f32.gmra.mrb[0].mxu0 %v354
        %v449 = vpop.f32.mrb[0].mxu0
        %v450 = vadd.f32 %v341, %v449
        %v451 = vpop.f32.mrb[0].mxu0
        %452 = vmatprep.mubr.f32.mxu0 0.0
        %453 = vmatmul.mubr.f32.gmra.mrb[0].mxu0 %v357
        %v454 = vpop.f32.mrb[0].mxu0
        %v455 = vadd.f32 %v341, %v454
        %v456 = vpop.f32.mrb[0].mxu0
        %457 = vmatprep.mubr.f32.mxu0 0.0
        %458 = vmatmul.mubr.f32.gmra.mrb[0].mxu0 %v360
        %v459 = vpop.f32.mrb[0].mxu0
        %v460 = vadd.f32 %v341, %v459
        %v461 = vpop.f32.mrb[0].mxu0
        %462 = vmatprep.mubr.f32.mxu0 0.0
        %463 = vmatmul.mubr.f32.gmra.mrb[0].mxu0 %v363
        %v464 = vpop.f32.mrb[0].mxu0
        %v465 = vadd.f32 %v341, %v464
        %v466 = vpop.f32.mrb[0].mxu0
        %467 = vmatprep.mubr.f32.mxu0 0.0
        %468 = vmatmul.mubr.f32.gmra.mrb[0].mxu0 %v366
        %v469 = vpop.f32.mrb[0].mxu0
        %v470 = vadd.f32 %v341, %v469
        %v471 = vpop.f32.mrb[0].mxu0
        %472 = vdwg.mxu0
        %v473 = vld [vmem:[%s5] sm:$0xff]
        %v474 = vld [vmem:[%s5 + $0x8] sm:$0xff]
        %v475 = vld [vmem:[%s5 + $0x10] sm:$0xff]
        %v476 = vld [vmem:[%s5 + $0x18] sm:$0xff]
        %v477 = vld [vmem:[%s5 + $0x20] sm:$0xff]
        %v478 = vld [vmem:[%s5 + $0x28] sm:$0xff]
        %v479 = vld [vmem:[%s5 + $0x30] sm:$0xff]
        %v480 = vld [vmem:[%s5 + $0x38] sm:$0xff]
        %v481 = vld [vmem:[%s5 + $0x40] sm:$0xff]
        %v482 = vld [vmem:[%s5 + $0x48] sm:$0xff]
        %v483 = vld [vmem:[%s5 + $0x50] sm:$0xff]
        %v484 = vld [vmem:[%s5 + $0x58] sm:$0xff]
        %v485 = vld [vmem:[%s5 + $0x60] sm:$0xff]
        %v486 = vld [vmem:[%s5 + $0x68] sm:$0xff]
        %v487 = vld [vmem:[%s5 + $0x70] sm:$0xff]
        %v488 = vld [vmem:[%s5 + $0x78] sm:$0xff]
        %v489 = vld [vmem:[%s5 + $0x80] sm:$0xff]
        %v490 = vld [vmem:[%s5 + $0x88] sm:$0xff]
        %v491 = vld [vmem:[%s5 + $0x90] sm:$0xff]
        %v492 = vld [vmem:[%s5 + $0x98] sm:$0xff]
        %v493 = vld [vmem:[%s5 + $0xa0] sm:$0xff]
        %v494 = vld [vmem:[%s5 + $0xa8] sm:$0xff]
        %v495 = vld [vmem:[%s5 + $0xb0] sm:$0xff]
        %v496 = vld [vmem:[%s5 + $0xb8] sm:$0xff]
        %v497 = vld [vmem:[%s5 + $0xc0] sm:$0xff]
        %v498 = vld [vmem:[%s5 + $0xc8] sm:$0xff]
        %v499 = vld [vmem:[%s5 + $0xd0] sm:$0xff]
        %v500 = vld [vmem:[%s5 + $0xd8] sm:$0xff]
        %v501 = vld [vmem:[%s5 + $0xe0] sm:$0xff]
        %v502 = vld [vmem:[%s5 + $0xe8] sm:$0xff]
        %v503 = vld [vmem:[%s5 + $0xf0] sm:$0xff]
        %v504 = vld [vmem:[%s5 + $0xf8] sm:$0xff]
        %537 = vrot.lane.b32.xlu0 %v473, 32
        %v538 = vpop.permute.xlu0 %537
        %539 = vrot.lane.b32.xlu0 %v474, 32
        %v540 = vpop.permute.xlu0 %539
        %541 = vrot.lane.b32.xlu0 %v475, 32
        %v542 = vpop.permute.xlu0 %541
        %543 = vrot.lane.b32.xlu0 %v476, 32
        %v544 = vpop.permute.xlu0 %543
        %545 = vrot.lane.b32.xlu0 %v477, 32
        %v546 = vpop.permute.xlu0 %545
        %547 = vrot.lane.b32.xlu0 %v478, 32
        %v548 = vpop.permute.xlu0 %547
        %549 = vrot.lane.b32.xlu0 %v479, 32
        %v550 = vpop.permute.xlu0 %549
        %551 = vrot.lane.b32.xlu0 %v480, 32
        %v552 = vpop.permute.xlu0 %551
        %553 = vrot.lane.b32.xlu0 %v481, 32
        %v554 = vpop.permute.xlu0 %553
        %555 = vrot.lane.b32.xlu0 %v482, 32
        %v556 = vpop.permute.xlu0 %555
        %557 = vrot.lane.b32.xlu0 %v483, 32
        %v558 = vpop.permute.xlu0 %557
        %559 = vrot.lane.b32.xlu0 %v484, 32
        %v560 = vpop.permute.xlu0 %559
        %561 = vrot.lane.b32.xlu0 %v485, 32
        %v562 = vpop.permute.xlu0 %561
        %563 = vrot.lane.b32.xlu0 %v486, 32
        %v564 = vpop.permute.xlu0 %563
        %565 = vrot.lane.b32.xlu0 %v487, 32
        %v566 = vpop.permute.xlu0 %565
        %567 = vrot.lane.b32.xlu0 %v488, 32
        %v568 = vpop.permute.xlu0 %567
        %569 = vrot.lane.b32.xlu0 %v489, 32
        %v570 = vpop.permute.xlu0 %569
        %571 = vrot.lane.b32.xlu0 %v490, 32
        %v572 = vpop.permute.xlu0 %571
        %573 = vrot.lane.b32.xlu0 %v491, 32
        %v574 = vpop.permute.xlu0 %573
        %575 = vrot.lane.b32.xlu0 %v492, 32
        %v576 = vpop.permute.xlu0 %575
        %577 = vrot.lane.b32.xlu0 %v493, 32
        %v578 = vpop.permute.xlu0 %577
        %579 = vrot.lane.b32.xlu0 %v494, 32
        %v580 = vpop.permute.xlu0 %579
        %581 = vrot.lane.b32.xlu0 %v495, 32
        %v582 = vpop.permute.xlu0 %581
        %583 = vrot.lane.b32.xlu0 %v496, 32
        %v584 = vpop.permute.xlu0 %583
        %585 = vrot.lane.b32.xlu0 %v497, 32
        %v586 = vpop.permute.xlu0 %585
        %587 = vrot.lane.b32.xlu0 %v498, 32
        %v588 = vpop.permute.xlu0 %587
        %589 = vrot.lane.b32.xlu0 %v499, 32
        %v590 = vpop.permute.xlu0 %589
        %591 = vrot.lane.b32.xlu0 %v500, 32
        %v592 = vpop.permute.xlu0 %591
        %593 = vrot.lane.b32.xlu0 %v501, 32
        %v594 = vpop.permute.xlu0 %593
        %595 = vrot.lane.b32.xlu0 %v502, 32
        %v596 = vpop.permute.xlu0 %595
        %597 = vrot.lane.b32.xlu0 %v503, 32
        %v598 = vpop.permute.xlu0 %597
        %599 = vrot.lane.b32.xlu0 %v504, 32
        %v600 = vpop.permute.xlu0 %599
        %v633 = vmul.f32 %v435, %v538
        %v634 = vmul.f32 %v440, %v540
        %v635 = vmul.f32 %v445, %v542
        %v636 = vmul.f32 %v450, %v544
        %v637 = vmul.f32 %v455, %v546
        %v638 = vmul.f32 %v460, %v548
        %v639 = vmul.f32 %v465, %v550
        %v640 = vmul.f32 %v470, %v552
        %v641 = vmul.f32 %v435, %v554
        %v642 = vmul.f32 %v440, %v556
        %v643 = vmul.f32 %v445, %v558
        %v644 = vmul.f32 %v450, %v560
        %v645 = vmul.f32 %v455, %v562
        %v646 = vmul.f32 %v460, %v564
        %v647 = vmul.f32 %v465, %v566
        %v648 = vmul.f32 %v470, %v568
        %v649 = vmul.f32 %v435, %v570
        %v650 = vmul.f32 %v440, %v572
        %v651 = vmul.f32 %v445, %v574
        %v652 = vmul.f32 %v450, %v576
        %v653 = vmul.f32 %v455, %v578
        %v654 = vmul.f32 %v460, %v580
        %v655 = vmul.f32 %v465, %v582
        %v656 = vmul.f32 %v470, %v584
        %v657 = vmul.f32 %v435, %v586
        %v658 = vmul.f32 %v440, %v588
        %v659 = vmul.f32 %v445, %v590
        %v660 = vmul.f32 %v450, %v592
        %v661 = vmul.f32 %v455, %v594
        %v662 = vmul.f32 %v460, %v596
        %v663 = vmul.f32 %v465, %v598
        %v664 = vmul.f32 %v470, %v600
        %665 = vrot.lane.b32.xlu0 %v473, 64
        %v666 = vpop.permute.xlu0 %665
        %667 = vrot.lane.b32.xlu0 %v474, 64
        %v668 = vpop.permute.xlu0 %667
        %669 = vrot.lane.b32.xlu0 %v475, 64
        %v670 = vpop.permute.xlu0 %669
        %671 = vrot.lane.b32.xlu0 %v476, 64
        %v672 = vpop.permute.xlu0 %671
        %673 = vrot.lane.b32.xlu0 %v477, 64
        %v674 = vpop.permute.xlu0 %673
        %675 = vrot.lane.b32.xlu0 %v478, 64
        %v676 = vpop.permute.xlu0 %675
        %677 = vrot.lane.b32.xlu0 %v479, 64
        %v678 = vpop.permute.xlu0 %677
        %679 = vrot.lane.b32.xlu0 %v480, 64
        %v680 = vpop.permute.xlu0 %679
        %681 = vrot.lane.b32.xlu0 %v481, 64
        %v682 = vpop.permute.xlu0 %681
        %683 = vrot.lane.b32.xlu0 %v482, 64
        %v684 = vpop.permute.xlu0 %683
        %685 = vrot.lane.b32.xlu0 %v483, 64
        %v686 = vpop.permute.xlu0 %685
        %687 = vrot.lane.b32.xlu0 %v484, 64
        %v688 = vpop.permute.xlu0 %687
        %689 = vrot.lane.b32.xlu0 %v485, 64
        %v690 = vpop.permute.xlu0 %689
        %691 = vrot.lane.b32.xlu0 %v486, 64
        %v692 = vpop.permute.xlu0 %691
        %693 = vrot.lane.b32.xlu0 %v487, 64
        %v694 = vpop.permute.xlu0 %693
        %695 = vrot.lane.b32.xlu0 %v488, 64
        %v696 = vpop.permute.xlu0 %695
        %697 = vrot.lane.b32.xlu0 %v489, 64
        %v698 = vpop.permute.xlu0 %697
        %699 = vrot.lane.b32.xlu0 %v490, 64
        %v700 = vpop.permute.xlu0 %699
        %701 = vrot.lane.b32.xlu0 %v491, 64
        %v702 = vpop.permute.xlu0 %701
        %703 = vrot.lane.b32.xlu0 %v492, 64
        %v704 = vpop.permute.xlu0 %703
        %705 = vrot.lane.b32.xlu0 %v493, 64
        %v706 = vpop.permute.xlu0 %705
        %707 = vrot.lane.b32.xlu0 %v494, 64
        %v708 = vpop.permute.xlu0 %707
        %709 = vrot.lane.b32.xlu0 %v495, 64
        %v710 = vpop.permute.xlu0 %709
        %711 = vrot.lane.b32.xlu0 %v496, 64
        %v712 = vpop.permute.xlu0 %711
        %713 = vrot.lane.b32.xlu0 %v497, 64
        %v714 = vpop.permute.xlu0 %713
        %715 = vrot.lane.b32.xlu0 %v498, 64
        %v716 = vpop.permute.xlu0 %715
        %717 = vrot.lane.b32.xlu0 %v499, 64
        %v718 = vpop.permute.xlu0 %717
        %719 = vrot.lane.b32.xlu0 %v500, 64
        %v720 = vpop.permute.xlu0 %719
        %721 = vrot.lane.b32.xlu0 %v501, 64
        %v722 = vpop.permute.xlu0 %721
        %723 = vrot.lane.b32.xlu0 %v502, 64
        %v724 = vpop.permute.xlu0 %723
        %725 = vrot.lane.b32.xlu0 %v503, 64
        %v726 = vpop.permute.xlu0 %725
        %727 = vrot.lane.b32.xlu0 %v504, 64
        %v728 = vpop.permute.xlu0 %727
        %v761 = vmul.f32 %v435, %v666
        %v762 = vmul.f32 %v440, %v668
        %v763 = vmul.f32 %v445, %v670
        %v764 = vmul.f32 %v450, %v672
        %v765 = vmul.f32 %v455, %v674
        %v766 = vmul.f32 %v460, %v676
        %v767 = vmul.f32 %v465, %v678
        %v768 = vmul.f32 %v470, %v680
        %v769 = vmul.f32 %v435, %v682
        %v770 = vmul.f32 %v440, %v684
        %v771 = vmul.f32 %v445, %v686
        %v772 = vmul.f32 %v450, %v688
        %v773 = vmul.f32 %v455, %v690
        %v774 = vmul.f32 %v460, %v692
        %v775 = vmul.f32 %v465, %v694
        %v776 = vmul.f32 %v470, %v696
        %v777 = vmul.f32 %v435, %v698
        %v778 = vmul.f32 %v440, %v700
        %v779 = vmul.f32 %v445, %v702
        %v780 = vmul.f32 %v450, %v704
        %v781 = vmul.f32 %v455, %v706
        %v782 = vmul.f32 %v460, %v708
        %v783 = vmul.f32 %v465, %v710
        %v784 = vmul.f32 %v470, %v712
        %v785 = vmul.f32 %v435, %v714
        %v786 = vmul.f32 %v440, %v716
        %v787 = vmul.f32 %v445, %v718
        %v788 = vmul.f32 %v450, %v720
        %v789 = vmul.f32 %v455, %v722
        %v790 = vmul.f32 %v460, %v724
        %v791 = vmul.f32 %v465, %v726
        %v792 = vmul.f32 %v470, %v728
        %825 = vrot.lane.b32.xlu0 %v633, 96
        %v826 = vpop.permute.xlu0 %825
        %827 = vrot.lane.b32.xlu0 %v634, 96
        %v828 = vpop.permute.xlu0 %827
        %829 = vrot.lane.b32.xlu0 %v635, 96
        %v830 = vpop.permute.xlu0 %829
        %831 = vrot.lane.b32.xlu0 %v636, 96
        %v832 = vpop.permute.xlu0 %831
        %833 = vrot.lane.b32.xlu0 %v637, 96
        %v834 = vpop.permute.xlu0 %833
        %835 = vrot.lane.b32.xlu0 %v638, 96
        %v836 = vpop.permute.xlu0 %835
        %837 = vrot.lane.b32.xlu0 %v639, 96
        %v838 = vpop.permute.xlu0 %837
        %839 = vrot.lane.b32.xlu0 %v640, 96
        %v840 = vpop.permute.xlu0 %839
        %841 = vrot.lane.b32.xlu0 %v641, 96
        %v842 = vpop.permute.xlu0 %841
        %843 = vrot.lane.b32.xlu0 %v642, 96
        %v844 = vpop.permute.xlu0 %843
        %845 = vrot.lane.b32.xlu0 %v643, 96
        %v846 = vpop.permute.xlu0 %845
        %847 = vrot.lane.b32.xlu0 %v644, 96
        %v848 = vpop.permute.xlu0 %847
        %849 = vrot.lane.b32.xlu0 %v645, 96
        %v850 = vpop.permute.xlu0 %849
        %851 = vrot.lane.b32.xlu0 %v646, 96
        %v852 = vpop.permute.xlu0 %851
        %853 = vrot.lane.b32.xlu0 %v647, 96
        %v854 = vpop.permute.xlu0 %853
        %855 = vrot.lane.b32.xlu0 %v648, 96
        %v856 = vpop.permute.xlu0 %855
        %857 = vrot.lane.b32.xlu0 %v649, 96
        %v858 = vpop.permute.xlu0 %857
        %859 = vrot.lane.b32.xlu0 %v650, 96
        %v860 = vpop.permute.xlu0 %859
        %861 = vrot.lane.b32.xlu0 %v651, 96
        %v862 = vpop.permute.xlu0 %861
        %863 = vrot.lane.b32.xlu0 %v652, 96
        %v864 = vpop.permute.xlu0 %863
        %865 = vrot.lane.b32.xlu0 %v653, 96
        %v866 = vpop.permute.xlu0 %865
        %867 = vrot.lane.b32.xlu0 %v654, 96
        %v868 = vpop.permute.xlu0 %867
        %869 = vrot.lane.b32.xlu0 %v655, 96
        %v870 = vpop.permute.xlu0 %869
        %871 = vrot.lane.b32.xlu0 %v656, 96
        %v872 = vpop.permute.xlu0 %871
        %873 = vrot.lane.b32.xlu0 %v657, 96
        %v874 = vpop.permute.xlu0 %873
        %875 = vrot.lane.b32.xlu0 %v658, 96
        %v876 = vpop.permute.xlu0 %875
        %877 = vrot.lane.b32.xlu0 %v659, 96
        %v878 = vpop.permute.xlu0 %877
        %879 = vrot.lane.b32.xlu0 %v660, 96
        %v880 = vpop.permute.xlu0 %879
        %881 = vrot.lane.b32.xlu0 %v661, 96
        %v882 = vpop.permute.xlu0 %881
        %883 = vrot.lane.b32.xlu0 %v662, 96
        %v884 = vpop.permute.xlu0 %883
        %885 = vrot.lane.b32.xlu0 %v663, 96
        %v886 = vpop.permute.xlu0 %885
        %887 = vrot.lane.b32.xlu0 %v664, 96
        %v888 = vpop.permute.xlu0 %887
        %v890 = vsel %vm343, %v435, 0
        %v893 = vsel %vm343, %v440, 0
        %v896 = vsel %vm343, %v445, 0
        %v899 = vsel %vm343, %v450, 0
        %v902 = vsel %vm343, %v455, 0
        %v905 = vsel %vm343, %v460, 0
        %v908 = vsel %vm343, %v465, 0
        %v911 = vsel %vm343, %v470, 0
        %v913 = vsel %vm343, %v826, 0
        %v915 = vsel %vm343, %v828, 0
        %v917 = vsel %vm343, %v830, 0
        %v919 = vsel %vm343, %v832, 0
        %v921 = vsel %vm343, %v834, 0
        %v923 = vsel %vm343, %v836, 0
        %v925 = vsel %vm343, %v838, 0
        %v927 = vsel %vm343, %v840, 0
        %v929 = vsel %vm343, %v842, 0
        %v931 = vsel %vm343, %v844, 0
        %v933 = vsel %vm343, %v846, 0
        %v935 = vsel %vm343, %v848, 0
        %v937 = vsel %vm343, %v850, 0
        %v939 = vsel %vm343, %v852, 0
        %v941 = vsel %vm343, %v854, 0
        %v943 = vsel %vm343, %v856, 0
        %v945 = vsel %vm343, %v858, 0
        %v947 = vsel %vm343, %v860, 0
        %v949 = vsel %vm343, %v862, 0
        %v951 = vsel %vm343, %v864, 0
        %v953 = vsel %vm343, %v866, 0
        %v955 = vsel %vm343, %v868, 0
        %v957 = vsel %vm343, %v870, 0
        %v959 = vsel %vm343, %v872, 0
        %v961 = vsel %vm343, %v874, 0
        %v963 = vsel %vm343, %v876, 0
        %v965 = vsel %vm343, %v878, 0
        %v967 = vsel %vm343, %v880, 0
        %v969 = vsel %vm343, %v882, 0
        %v971 = vsel %vm343, %v884, 0
        %v973 = vsel %vm343, %v886, 0
        %v975 = vsel %vm343, %v888, 0
        %977 = vmatprep.subr.mxu0 0.0
        %978 = vmatpush1.xpose.msra.mxu0 %v913
        %979 = vmatprep.subr.mxu0 0.0
        %980 = vmatpush1.xpose.msra.mxu0 %v915
        %981 = vmatprep.subr.mxu0 0.0
        %982 = vmatpush1.xpose.msra.mxu0 %v917
        %983 = vmatprep.subr.mxu0 0.0
        %984 = vmatpush1.xpose.msra.mxu0 %v919
        %985 = vmatprep.subr.mxu0 0.0
        %986 = vmatpush1.xpose.msra.mxu0 %v921
        %987 = vmatprep.subr.mxu0 0.0
        %988 = vmatpush1.xpose.msra.mxu0 %v923
        %989 = vmatprep.subr.mxu0 0.0
        %990 = vmatpush1.xpose.msra.mxu0 %v925
        %991 = vmatprep.subr.mxu0 0.0
        %992 = vmatpush1.xpose.msra.mxu0 %v927
        %993 = vmatprep.subr.mxu0 0.0
        %994 = vmatpush1.xpose.msra.mxu0 %v929
        %995 = vmatprep.subr.mxu0 0.0
        %996 = vmatpush1.xpose.msra.mxu0 %v931
        %997 = vmatprep.subr.mxu0 0.0
        %998 = vmatpush1.xpose.msra.mxu0 %v933
        %999 = vmatprep.subr.mxu0 0.0
        %1000 = vmatpush1.xpose.msra.mxu0 %v935
        %1001 = vmatprep.subr.mxu0 0.0
        %1002 = vmatpush1.xpose.msra.mxu0 %v937
        %1003 = vmatprep.subr.mxu0 0.0
        %1004 = vmatpush1.xpose.msra.mxu0 %v939
        %1005 = vmatprep.subr.mxu0 0.0
        %1006 = vmatpush1.xpose.msra.mxu0 %v941
        %1007 = vmatprep.subr.mxu0 0.0
        %1008 = vmatpush1.xpose.msra.mxu0 %v943
        %1009 = vmatprep.subr.mxu0 0.0
        %1010 = vmatpush1.xpose.msra.mxu0 %v945
        %1011 = vmatprep.subr.mxu0 0.0
        %1012 = vmatpush1.xpose.msra.mxu0 %v947
        %1013 = vmatprep.subr.mxu0 0.0
        %1014 = vmatpush1.xpose.msra.mxu0 %v949
        %1015 = vmatprep.subr.mxu0 0.0
        %1016 = vmatpush1.xpose.msra.mxu0 %v951
        %1017 = vmatprep.subr.mxu0 0.0
        %1018 = vmatpush1.xpose.msra.mxu0 %v953
        %1019 = vmatprep.subr.mxu0 0.0
        %1020 = vmatpush1.xpose.msra.mxu0 %v955
        %1021 = vmatprep.subr.mxu0 0.0
        %1022 = vmatpush1.xpose.msra.mxu0 %v957
        %1023 = vmatprep.subr.mxu0 0.0
        %1024 = vmatpush1.xpose.msra.mxu0 %v959
        %1025 = vmatprep.subr.mxu0 0.0
        %1026 = vmatpush1.xpose.msra.mxu0 %v961
        %1027 = vmatprep.subr.mxu0 0.0
        %1028 = vmatpush1.xpose.msra.mxu0 %v963
        %1029 = vmatprep.subr.mxu0 0.0
        %1030 = vmatpush1.xpose.msra.mxu0 %v965
        %1031 = vmatprep.subr.mxu0 0.0
        %1032 = vmatpush1.xpose.msra.mxu0 %v967
        %1033 = vmatprep.subr.mxu0 0.0
        %1034 = vmatpush1.xpose.msra.mxu0 %v969
        %1035 = vmatprep.subr.mxu0 0.0
        %1036 = vmatpush1.xpose.msra.mxu0 %v971
        %1037 = vmatprep.subr.mxu0 0.0
        %1038 = vmatpush1.xpose.msra.mxu0 %v973
        %1039 = vmatprep.subr.mxu0 0.0
        %1040 = vmatpush1.xpose.msra.mxu0 %v975
        %1041 = vmatprep.mubr.f32.mxu0 0.0
        %1042 = vmatmul.mubr.f32.gmra.mrb[0].mxu0 %v890
        %v1043 = vpop.f32.mrb[0].mxu0
        %v1044 = vadd.f32 0.0, %v1043
        %v1045 = vpop.f32.mrb[0].mxu0
        %v1046 = vadd.f32 0.0, %v1045
        %1047 = vmatprep.mubr.f32.mxu0 0.0
        %1048 = vmatmul.mubr.f32.gmra.mrb[0].mxu0 %v893
        %v1049 = vpop.f32.mrb[0].mxu0
        %v1050 = vadd.f32 0.0, %v1049
        %v1051 = vpop.f32.mrb[0].mxu0
        %v1052 = vadd.f32 0.0, %v1051
        %1053 = vmatprep.mubr.f32.mxu0 0.0
        %1054 = vmatmul.mubr.f32.gmra.mrb[0].mxu0 %v896
        %v1055 = vpop.f32.mrb[0].mxu0
        %v1056 = vadd.f32 0.0, %v1055
        %v1057 = vpop.f32.mrb[0].mxu0
        %v1058 = vadd.f32 0.0, %v1057
        %1059 = vmatprep.mubr.f32.mxu0 0.0
        %1060 = vmatmul.mubr.f32.gmra.mrb[0].mxu0 %v899
        %v1061 = vpop.f32.mrb[0].mxu0
        %v1062 = vadd.f32 0.0, %v1061
        %v1063 = vpop.f32.mrb[0].mxu0
        %v1064 = vadd.f32 0.0, %v1063
        %1065 = vmatprep.mubr.f32.mxu0 0.0
        %1066 = vmatmul.mubr.f32.gmra.mrb[0].mxu0 %v902
        %v1067 = vpop.f32.mrb[0].mxu0
        %v1068 = vadd.f32 0.0, %v1067
        %v1069 = vpop.f32.mrb[0].mxu0
        %v1070 = vadd.f32 0.0, %v1069
        %1071 = vmatprep.mubr.f32.mxu0 0.0
        %1072 = vmatmul.mubr.f32.gmra.mrb[0].mxu0 %v905
        %v1073 = vpop.f32.mrb[0].mxu0
        %v1074 = vadd.f32 0.0, %v1073
        %v1075 = vpop.f32.mrb[0].mxu0
        %v1076 = vadd.f32 0.0, %v1075
        %1077 = vmatprep.mubr.f32.mxu0 0.0
        %1078 = vmatmul.mubr.f32.gmra.mrb[0].mxu0 %v908
        %v1079 = vpop.f32.mrb[0].mxu0
        %v1080 = vadd.f32 0.0, %v1079
        %v1081 = vpop.f32.mrb[0].mxu0
        %v1082 = vadd.f32 0.0, %v1081
        %1083 = vmatprep.mubr.f32.mxu0 0.0
        %1084 = vmatmul.mubr.f32.gmra.mrb[0].mxu0 %v911
        %v1085 = vpop.f32.mrb[0].mxu0
        %v1086 = vadd.f32 0.0, %v1085
        %v1087 = vpop.f32.mrb[0].mxu0
        %v1088 = vadd.f32 0.0, %v1087
        %1089 = vdwg.mxu0
        %v1090 = vld [vmem:[%s6] sm:$0xff]
        %v1091 = vld [vmem:[%s6 + $0x8] sm:$0xff]
        %v1092 = vld [vmem:[%s6 + $0x10] sm:$0xff]
        %v1093 = vld [vmem:[%s6 + $0x18] sm:$0xff]
        %v1094 = vld [vmem:[%s6 + $0x20] sm:$0xff]
        %v1095 = vld [vmem:[%s6 + $0x28] sm:$0xff]
        %v1096 = vld [vmem:[%s6 + $0x30] sm:$0xff]
        %v1097 = vld [vmem:[%s6 + $0x38] sm:$0xff]
        %v1098 = vld [vmem:[%s6 + $0x40] sm:$0xff]
        %v1099 = vld [vmem:[%s6 + $0x48] sm:$0xff]
        %v1100 = vld [vmem:[%s6 + $0x50] sm:$0xff]
        %v1101 = vld [vmem:[%s6 + $0x58] sm:$0xff]
        %v1102 = vld [vmem:[%s6 + $0x60] sm:$0xff]
        %v1103 = vld [vmem:[%s6 + $0x68] sm:$0xff]
        %v1104 = vld [vmem:[%s6 + $0x70] sm:$0xff]
        %v1105 = vld [vmem:[%s6 + $0x78] sm:$0xff]
        %v1106 = vmax.f32 %v1044, %v1046
        %1107 = vmax.xlane.f32.xlu0 %v1106
        %v1108 = vpop.xlane.xlu0 %1107
        %v1109 = vmax.f32 %v1050, %v1052
        %1110 = vmax.xlane.f32.xlu0 %v1109
        %v1111 = vpop.xlane.xlu0 %1110
        %v1112 = vmax.f32 %v1056, %v1058
        %1113 = vmax.xlane.f32.xlu0 %v1112
        %v1114 = vpop.xlane.xlu0 %1113
        %v1115 = vmax.f32 %v1062, %v1064
        %1116 = vmax.xlane.f32.xlu0 %v1115
        %v1117 = vpop.xlane.xlu0 %1116
        %v1118 = vmax.f32 %v1068, %v1070
        %1119 = vmax.xlane.f32.xlu0 %v1118
        %v1120 = vpop.xlane.xlu0 %1119
        %v1121 = vmax.f32 %v1074, %v1076
        %1122 = vmax.xlane.f32.xlu0 %v1121
        %v1123 = vpop.xlane.xlu0 %1122
        %v1124 = vmax.f32 %v1080, %v1082
        %1125 = vmax.xlane.f32.xlu0 %v1124
        %v1126 = vpop.xlane.xlu0 %1125
        %v1127 = vmax.f32 %v1086, %v1088
        %1128 = vmax.xlane.f32.xlu0 %v1127
        %v1129 = vpop.xlane.xlu0 %1128
        %v1130 = vsub.f32 %v1044, %v1108
        %v1131 = vsub.f32 %v1046, %v1108
        %v1132 = vsub.f32 %v1050, %v1111
        %v1133 = vsub.f32 %v1052, %v1111
        %v1134 = vsub.f32 %v1056, %v1114
        %v1135 = vsub.f32 %v1058, %v1114
        %v1136 = vsub.f32 %v1062, %v1117
        %v1137 = vsub.f32 %v1064, %v1117
        %v1138 = vsub.f32 %v1068, %v1120
        %v1139 = vsub.f32 %v1070, %v1120
        %v1140 = vsub.f32 %v1074, %v1123
        %v1141 = vsub.f32 %v1076, %v1123
        %v1142 = vsub.f32 %v1080, %v1126
        %v1143 = vsub.f32 %v1082, %v1126
        %v1144 = vsub.f32 %v1086, %v1129
        %v1145 = vsub.f32 %v1088, %v1129
        %v1146 = vmul.f32 %v1130, 1.442695
        %v1147 = vpow.pop %v1146
        %v1148 = vmul.f32 %v1131, 1.442695
        %v1149 = vpow.pop %v1148
        %v1150 = vmul.f32 %v1132, 1.442695
        %v1151 = vpow.pop %v1150
        %v1152 = vmul.f32 %v1133, 1.442695
        %v1153 = vpow.pop %v1152
        %v1154 = vmul.f32 %v1134, 1.442695
        %v1155 = vpow.pop %v1154
        %v1156 = vmul.f32 %v1135, 1.442695
        %v1157 = vpow.pop %v1156
        %v1158 = vmul.f32 %v1136, 1.442695
        %v1159 = vpow.pop %v1158
        %v1160 = vmul.f32 %v1137, 1.442695
        %v1161 = vpow.pop %v1160
        %v1162 = vmul.f32 %v1138, 1.442695
        %v1163 = vpow.pop %v1162
        %v1164 = vmul.f32 %v1139, 1.442695
        %v1165 = vpow.pop %v1164
        %v1166 = vmul.f32 %v1140, 1.442695
        %v1167 = vpow.pop %v1166
        %v1168 = vmul.f32 %v1141, 1.442695
        %v1169 = vpow.pop %v1168
        %v1170 = vmul.f32 %v1142, 1.442695
        %v1171 = vpow.pop %v1170
        %v1172 = vmul.f32 %v1143, 1.442695
        %v1173 = vpow.pop %v1172
        %v1174 = vmul.f32 %v1144, 1.442695
        %v1175 = vpow.pop %v1174
        %v1176 = vmul.f32 %v1145, 1.442695
        %v1177 = vpow.pop %v1176
        %v1178 = vmul.f32 %v1147, %v1090
        %v1179 = vmul.f32 %v1149, %v1091
        %v1180 = vmul.f32 %v1151, %v1092
        %v1181 = vmul.f32 %v1153, %v1093
        %v1182 = vmul.f32 %v1155, %v1094
        %v1183 = vmul.f32 %v1157, %v1095
        %v1184 = vmul.f32 %v1159, %v1096
        %v1185 = vmul.f32 %v1161, %v1097
        %v1186 = vmul.f32 %v1163, %v1098
        %v1187 = vmul.f32 %v1165, %v1099
        %v1188 = vmul.f32 %v1167, %v1100
        %v1189 = vmul.f32 %v1169, %v1101
        %v1190 = vmul.f32 %v1171, %v1102
        %v1191 = vmul.f32 %v1173, %v1103
        %v1192 = vmul.f32 %v1175, %v1104
        %v1193 = vmul.f32 %v1177, %v1105
        %v1194 = vld [vmem:[#allocation2] sm:$0xff]
        %v1195 = vld [vmem:[#allocation2 + $0x8] sm:$0xff]
        %v1196 = vld [vmem:[#allocation2 + $0x10] sm:$0xff]
        %v1197 = vld [vmem:[#allocation2 + $0x18] sm:$0xff]
        %v1198 = vld [vmem:[#allocation2 + $0x20] sm:$0xff]
        %v1199 = vld [vmem:[#allocation2 + $0x28] sm:$0xff]
        %v1200 = vld [vmem:[#allocation2 + $0x30] sm:$0xff]
        %v1201 = vld [vmem:[#allocation2 + $0x38] sm:$0xff]
        %v1202 = vld [vmem:[#allocation2 + $0x40] sm:$0xff]
        %v1203 = vld [vmem:[#allocation2 + $0x48] sm:$0xff]
        %v1204 = vld [vmem:[#allocation2 + $0x50] sm:$0xff]
        %v1205 = vld [vmem:[#allocation2 + $0x58] sm:$0xff]
        %v1206 = vld [vmem:[#allocation2 + $0x60] sm:$0xff]
        %v1207 = vld [vmem:[#allocation2 + $0x68] sm:$0xff]
        %v1208 = vld [vmem:[#allocation2 + $0x70] sm:$0xff]
        %v1209 = vld [vmem:[#allocation2 + $0x78] sm:$0xff]
        %v1210 = vld [vmem:[#allocation2 + $0x80] sm:$0xff]
        %v1211 = vld [vmem:[#allocation2 + $0x88] sm:$0xff]
        %v1212 = vld [vmem:[#allocation2 + $0x90] sm:$0xff]
        %v1213 = vld [vmem:[#allocation2 + $0x98] sm:$0xff]
        %v1214 = vld [vmem:[#allocation2 + $0xa0] sm:$0xff]
        %v1215 = vld [vmem:[#allocation2 + $0xa8] sm:$0xff]
        %v1216 = vld [vmem:[#allocation2 + $0xb0] sm:$0xff]
        %v1217 = vld [vmem:[#allocation2 + $0xb8] sm:$0xff]
        %v1218 = vld [vmem:[#allocation2 + $0xc0] sm:$0xff]
        %v1219 = vld [vmem:[#allocation2 + $0xc8] sm:$0xff]
        %v1220 = vld [vmem:[#allocation2 + $0xd0] sm:$0xff]
        %v1221 = vld [vmem:[#allocation2 + $0xd8] sm:$0xff]
        %v1222 = vld [vmem:[#allocation2 + $0xe0] sm:$0xff]
        %v1223 = vld [vmem:[#allocation2 + $0xe8] sm:$0xff]
        %v1224 = vld [vmem:[#allocation2 + $0xf0] sm:$0xff]
        %v1225 = vld [vmem:[#allocation2 + $0xf8] sm:$0xff]
        %v1226 = vld [vmem:[#allocation2 + $0x100] sm:$0xff]
        %v1227 = vld [vmem:[#allocation2 + $0x108] sm:$0xff]
        %v1228 = vld [vmem:[#allocation2 + $0x110] sm:$0xff]
        %v1229 = vld [vmem:[#allocation2 + $0x118] sm:$0xff]
        %v1230 = vld [vmem:[#allocation2 + $0x120] sm:$0xff]
        %v1231 = vld [vmem:[#allocation2 + $0x128] sm:$0xff]
        %v1232 = vld [vmem:[#allocation2 + $0x130] sm:$0xff]
        %v1233 = vld [vmem:[#allocation2 + $0x138] sm:$0xff]
        %v1234 = vld [vmem:[#allocation2 + $0x140] sm:$0xff]
        %v1235 = vld [vmem:[#allocation2 + $0x148] sm:$0xff]
        %v1236 = vld [vmem:[#allocation2 + $0x150] sm:$0xff]
        %v1237 = vld [vmem:[#allocation2 + $0x158] sm:$0xff]
        %v1238 = vld [vmem:[#allocation2 + $0x160] sm:$0xff]
        %v1239 = vld [vmem:[#allocation2 + $0x168] sm:$0xff]
        %v1240 = vld [vmem:[#allocation2 + $0x170] sm:$0xff]
        %v1241 = vld [vmem:[#allocation2 + $0x178] sm:$0xff]
        %v1242 = vld [vmem:[#allocation2 + $0x180] sm:$0xff]
        %v1243 = vld [vmem:[#allocation2 + $0x188] sm:$0xff]
        %v1244 = vld [vmem:[#allocation2 + $0x190] sm:$0xff]
        %v1245 = vld [vmem:[#allocation2 + $0x198] sm:$0xff]
        %v1246 = vld [vmem:[#allocation2 + $0x1a0] sm:$0xff]
        %v1247 = vld [vmem:[#allocation2 + $0x1a8] sm:$0xff]
        %v1248 = vld [vmem:[#allocation2 + $0x1b0] sm:$0xff]
        %v1249 = vld [vmem:[#allocation2 + $0x1b8] sm:$0xff]
        %v1250 = vld [vmem:[#allocation2 + $0x1c0] sm:$0xff]
        %v1251 = vld [vmem:[#allocation2 + $0x1c8] sm:$0xff]
        %v1252 = vld [vmem:[#allocation2 + $0x1d0] sm:$0xff]
        %v1253 = vld [vmem:[#allocation2 + $0x1d8] sm:$0xff]
        %v1254 = vld [vmem:[#allocation2 + $0x1e0] sm:$0xff]
        %v1255 = vld [vmem:[#allocation2 + $0x1e8] sm:$0xff]
        %v1256 = vld [vmem:[#allocation2 + $0x1f0] sm:$0xff]
        %v1257 = vld [vmem:[#allocation2 + $0x1f8] sm:$0xff]
        %1258 = vmatprep.subr.mxu0 %v1195
        %1259 = vmatpush1.msra.mxu0 %v1194
        %1260 = vmatprep.subr.mxu0 %v1197
        %1261 = vmatpush1.msra.mxu0 %v1196
        %1262 = vmatprep.subr.mxu0 %v1199
        %1263 = vmatpush1.msra.mxu0 %v1198
        %1264 = vmatprep.subr.mxu0 %v1201
        %1265 = vmatpush1.msra.mxu0 %v1200
        %1266 = vmatprep.subr.mxu0 %v1203
        %1267 = vmatpush1.msra.mxu0 %v1202
        %1268 = vmatprep.subr.mxu0 %v1205
        %1269 = vmatpush1.msra.mxu0 %v1204
        %1270 = vmatprep.subr.mxu0 %v1207
        %1271 = vmatpush1.msra.mxu0 %v1206
        %1272 = vmatprep.subr.mxu0 %v1209
        %1273 = vmatpush1.msra.mxu0 %v1208
        %1274 = vmatprep.subr.mxu0 %v1211
        %1275 = vmatpush1.msra.mxu0 %v1210
        %1276 = vmatprep.subr.mxu0 %v1213
        %1277 = vmatpush1.msra.mxu0 %v1212
        %1278 = vmatprep.subr.mxu0 %v1215
        %1279 = vmatpush1.msra.mxu0 %v1214
        %1280 = vmatprep.subr.mxu0 %v1217
        %1281 = vmatpush1.msra.mxu0 %v1216
        %1282 = vmatprep.subr.mxu0 %v1219
        %1283 = vmatpush1.msra.mxu0 %v1218
        %1284 = vmatprep.subr.mxu0 %v1221
        %1285 = vmatpush1.msra.mxu0 %v1220
        %1286 = vmatprep.subr.mxu0 %v1223
        %1287 = vmatpush1.msra.mxu0 %v1222
        %1288 = vmatprep.subr.mxu0 %v1225
        %1289 = vmatpush1.msra.mxu0 %v1224
        %1290 = vmatprep.subr.mxu0 %v1227
        %1291 = vmatpush1.msra.mxu0 %v1226
        %1292 = vmatprep.subr.mxu0 %v1229
        %1293 = vmatpush1.msra.mxu0 %v1228
        %1294 = vmatprep.subr.mxu0 %v1231
        %1295 = vmatpush1.msra.mxu0 %v1230
        %1296 = vmatprep.subr.mxu0 %v1233
        %1297 = vmatpush1.msra.mxu0 %v1232
        %1298 = vmatprep.subr.mxu0 %v1235
        %1299 = vmatpush1.msra.mxu0 %v1234
        %1300 = vmatprep.subr.mxu0 %v1237
        %1301 = vmatpush1.msra.mxu0 %v1236
        %1302 = vmatprep.subr.mxu0 %v1239
        %1303 = vmatpush1.msra.mxu0 %v1238
        %1304 = vmatprep.subr.mxu0 %v1241
        %1305 = vmatpush1.msra.mxu0 %v1240
        %1306 = vmatprep.subr.mxu0 %v1243
        %1307 = vmatpush1.msra.mxu0 %v1242
        %1308 = vmatprep.subr.mxu0 %v1245
        %1309 = vmatpush1.msra.mxu0 %v1244
        %1310 = vmatprep.subr.mxu0 %v1247
        %1311 = vmatpush1.msra.mxu0 %v1246
        %1312 = vmatprep.subr.mxu0 %v1249
        %1313 = vmatpush1.msra.mxu0 %v1248
        %1314 = vmatprep.subr.mxu0 %v1251
        %1315 = vmatpush1.msra.mxu0 %v1250
        %1316 = vmatprep.subr.mxu0 %v1253
        %1317 = vmatpush1.msra.mxu0 %v1252
        %1318 = vmatprep.subr.mxu0 %v1255
        %1319 = vmatpush1.msra.mxu0 %v1254
        %1320 = vmatprep.subr.mxu0 %v1257
        %1321 = vmatpush1.msra.mxu0 %v1256
        %1322 = vmatprep.mubr.f32.mxu0 %v1179
        %1323 = vmatmul.mubr.f32.gmra.mrb[0].mxu0 %v1178
        %v1324 = vpop.f32.mrb[0].mxu0
        %v1325 = vadd.f32 0.0, %v1324
        %v1326 = vpop.f32.mrb[0].mxu0
        %v1327 = vadd.f32 0.0, %v1326
        %1328 = vmatprep.mubr.f32.mxu0 %v1181
        %1329 = vmatmul.mubr.f32.gmra.mrb[0].mxu0 %v1180
        %v1330 = vpop.f32.mrb[0].mxu0
        %v1331 = vadd.f32 0.0, %v1330
        %v1332 = vpop.f32.mrb[0].mxu0
        %v1333 = vadd.f32 0.0, %v1332
        %1334 = vmatprep.mubr.f32.mxu0 %v1183
        %1335 = vmatmul.mubr.f32.gmra.mrb[0].mxu0 %v1182
        %v1336 = vpop.f32.mrb[0].mxu0
        %v1337 = vadd.f32 0.0, %v1336
        %v1338 = vpop.f32.mrb[0].mxu0
        %v1339 = vadd.f32 0.0, %v1338
        %1340 = vmatprep.mubr.f32.mxu0 %v1185
        %1341 = vmatmul.mubr.f32.gmra.mrb[0].mxu0 %v1184
        %v1342 = vpop.f32.mrb[0].mxu0
        %v1343 = vadd.f32 0.0, %v1342
        %v1344 = vpop.f32.mrb[0].mxu0
        %v1345 = vadd.f32 0.0, %v1344
        %1346 = vmatprep.mubr.f32.mxu0 %v1187
        %1347 = vmatmul.mubr.f32.gmra.mrb[0].mxu0 %v1186
        %v1348 = vpop.f32.mrb[0].mxu0
        %v1349 = vadd.f32 0.0, %v1348
        %v1350 = vpop.f32.mrb[0].mxu0
        %v1351 = vadd.f32 0.0, %v1350
        %1352 = vmatprep.mubr.f32.mxu0 %v1189
        %1353 = vmatmul.mubr.f32.gmra.mrb[0].mxu0 %v1188
        %v1354 = vpop.f32.mrb[0].mxu0
        %v1355 = vadd.f32 0.0, %v1354
        %v1356 = vpop.f32.mrb[0].mxu0
        %v1357 = vadd.f32 0.0, %v1356
        %1358 = vmatprep.mubr.f32.mxu0 %v1191
        %1359 = vmatmul.mubr.f32.gmra.mrb[0].mxu0 %v1190
        %v1360 = vpop.f32.mrb[0].mxu0
        %v1361 = vadd.f32 0.0, %v1360
        %v1362 = vpop.f32.mrb[0].mxu0
        %v1363 = vadd.f32 0.0, %v1362
        %1364 = vmatprep.mubr.f32.mxu0 %v1193
        %1365 = vmatmul.mubr.f32.gmra.mrb[0].mxu0 %v1192
        %v1366 = vpop.f32.mrb[0].mxu0
        %v1367 = vadd.f32 0.0, %v1366
        %v1368 = vpop.f32.mrb[0].mxu0
        %v1369 = vadd.f32 0.0, %v1368
        %1370 = vdwg.mxu0
        %v1371 = vmax.f32 %v1325, 1e-30
        %v1372 = vmax.f32 %v1327, 1e-30
        %v1373 = vmax.f32 %v1331, 1e-30
        %v1374 = vmax.f32 %v1333, 1e-30
        %v1375 = vmax.f32 %v1337, 1e-30
        %v1376 = vmax.f32 %v1339, 1e-30
        %v1377 = vmax.f32 %v1343, 1e-30
        %v1378 = vmax.f32 %v1345, 1e-30
        %v1379 = vmax.f32 %v1349, 1e-30
        %v1380 = vmax.f32 %v1351, 1e-30
        %v1381 = vmax.f32 %v1355, 1e-30
        %v1382 = vmax.f32 %v1357, 1e-30
        %v1383 = vmax.f32 %v1361, 1e-30
        %v1384 = vmax.f32 %v1363, 1e-30
        %v1385 = vmax.f32 %v1367, 1e-30
        %v1386 = vmax.f32 %v1369, 1e-30
        %v1387 = vrcp.pop %v1371
        %v1388 = vrcp.pop %v1372
        %v1389 = vrcp.pop %v1373
        %v1390 = vrcp.pop %v1374
        %v1391 = vrcp.pop %v1375
        %v1392 = vrcp.pop %v1376
        %v1393 = vrcp.pop %v1377
        %v1394 = vrcp.pop %v1378
        %v1395 = vrcp.pop %v1379
        %v1396 = vrcp.pop %v1380
        %v1397 = vrcp.pop %v1381
        %v1398 = vrcp.pop %v1382
        %v1399 = vrcp.pop %v1383
        %v1400 = vrcp.pop %v1384
        %v1401 = vrcp.pop %v1385
        %v1402 = vrcp.pop %v1386
        %v1403 = vmul.f32 %v1178, %v1387
        %v1404 = vmul.f32 %v1179, %v1388
        %v1405 = vmul.f32 %v1180, %v1389
        %v1406 = vmul.f32 %v1181, %v1390
        %v1407 = vmul.f32 %v1182, %v1391
        %v1408 = vmul.f32 %v1183, %v1392
        %v1409 = vmul.f32 %v1184, %v1393
        %v1410 = vmul.f32 %v1185, %v1394
        %v1411 = vmul.f32 %v1186, %v1395
        %v1412 = vmul.f32 %v1187, %v1396
        %v1413 = vmul.f32 %v1188, %v1397
        %v1414 = vmul.f32 %v1189, %v1398
        %v1415 = vmul.f32 %v1190, %v1399
        %v1416 = vmul.f32 %v1191, %v1400
        %v1417 = vmul.f32 %v1192, %v1401
        %v1418 = vmul.f32 %v1193, %v1402
        %v1419 = vsub.f32 1.0, %v1403
        %v1420 = vsub.f32 1.0, %v1404
        %v1421 = vsub.f32 1.0, %v1405
        %v1422 = vsub.f32 1.0, %v1406
        %v1423 = vsub.f32 1.0, %v1407
        %v1424 = vsub.f32 1.0, %v1408
        %v1425 = vsub.f32 1.0, %v1409
        %v1426 = vsub.f32 1.0, %v1410
        %v1427 = vsub.f32 1.0, %v1411
        %v1428 = vsub.f32 1.0, %v1412
        %v1429 = vsub.f32 1.0, %v1413
        %v1430 = vsub.f32 1.0, %v1414
        %v1431 = vsub.f32 1.0, %v1415
        %v1432 = vsub.f32 1.0, %v1416
        %v1433 = vsub.f32 1.0, %v1417
        %v1434 = vsub.f32 1.0, %v1418
        %v1435 = vmul.f32 %v1419, %v1090
        %v1436 = vmul.f32 %v1420, %v1091
        %v1437 = vmul.f32 %v1421, %v1092
        %v1438 = vmul.f32 %v1422, %v1093
        %v1439 = vmul.f32 %v1423, %v1094
        %v1440 = vmul.f32 %v1424, %v1095
        %v1441 = vmul.f32 %v1425, %v1096
        %v1442 = vmul.f32 %v1426, %v1097
        %v1443 = vmul.f32 %v1427, %v1098
        %v1444 = vmul.f32 %v1428, %v1099
        %v1445 = vmul.f32 %v1429, %v1100
        %v1446 = vmul.f32 %v1430, %v1101
        %v1447 = vmul.f32 %v1431, %v1102
        %v1448 = vmul.f32 %v1432, %v1103
        %v1449 = vmul.f32 %v1433, %v1104
        %v1450 = vmul.f32 %v1434, %v1105
        %1483 = vrot.lane.b32.xlu0 %v761, 64
        %v1484 = vpop.permute.xlu0 %1483
        %1485 = vrot.lane.b32.xlu0 %v762, 64
        %v1486 = vpop.permute.xlu0 %1485
        %1487 = vrot.lane.b32.xlu0 %v763, 64
        %v1488 = vpop.permute.xlu0 %1487
        %1489 = vrot.lane.b32.xlu0 %v764, 64
        %v1490 = vpop.permute.xlu0 %1489
        %1491 = vrot.lane.b32.xlu0 %v765, 64
        %v1492 = vpop.permute.xlu0 %1491
        %1493 = vrot.lane.b32.xlu0 %v766, 64
        %v1494 = vpop.permute.xlu0 %1493
        %1495 = vrot.lane.b32.xlu0 %v767, 64
        %v1496 = vpop.permute.xlu0 %1495
        %1497 = vrot.lane.b32.xlu0 %v768, 64
        %v1498 = vpop.permute.xlu0 %1497
        %1499 = vrot.lane.b32.xlu0 %v769, 64
        %v1500 = vpop.permute.xlu0 %1499
        %1501 = vrot.lane.b32.xlu0 %v770, 64
        %v1502 = vpop.permute.xlu0 %1501
        %1503 = vrot.lane.b32.xlu0 %v771, 64
        %v1504 = vpop.permute.xlu0 %1503
        %1505 = vrot.lane.b32.xlu0 %v772, 64
        %v1506 = vpop.permute.xlu0 %1505
        %1507 = vrot.lane.b32.xlu0 %v773, 64
        %v1508 = vpop.permute.xlu0 %1507
        %1509 = vrot.lane.b32.xlu0 %v774, 64
        %v1510 = vpop.permute.xlu0 %1509
        %1511 = vrot.lane.b32.xlu0 %v775, 64
        %v1512 = vpop.permute.xlu0 %1511
        %1513 = vrot.lane.b32.xlu0 %v776, 64
        %v1514 = vpop.permute.xlu0 %1513
        %1515 = vrot.lane.b32.xlu0 %v777, 64
        %v1516 = vpop.permute.xlu0 %1515
        %1517 = vrot.lane.b32.xlu0 %v778, 64
        %v1518 = vpop.permute.xlu0 %1517
        %1519 = vrot.lane.b32.xlu0 %v779, 64
        %v1520 = vpop.permute.xlu0 %1519
        %1521 = vrot.lane.b32.xlu0 %v780, 64
        %v1522 = vpop.permute.xlu0 %1521
        %1523 = vrot.lane.b32.xlu0 %v781, 64
        %v1524 = vpop.permute.xlu0 %1523
        %1525 = vrot.lane.b32.xlu0 %v782, 64
        %v1526 = vpop.permute.xlu0 %1525
        %1527 = vrot.lane.b32.xlu0 %v783, 64
        %v1528 = vpop.permute.xlu0 %1527
        %1529 = vrot.lane.b32.xlu0 %v784, 64
        %v1530 = vpop.permute.xlu0 %1529
        %1531 = vrot.lane.b32.xlu0 %v785, 64
        %v1532 = vpop.permute.xlu0 %1531
        %1533 = vrot.lane.b32.xlu0 %v786, 64
        %v1534 = vpop.permute.xlu0 %1533
        %1535 = vrot.lane.b32.xlu0 %v787, 64
        %v1536 = vpop.permute.xlu0 %1535
        %1537 = vrot.lane.b32.xlu0 %v788, 64
        %v1538 = vpop.permute.xlu0 %1537
        %1539 = vrot.lane.b32.xlu0 %v789, 64
        %v1540 = vpop.permute.xlu0 %1539
        %1541 = vrot.lane.b32.xlu0 %v790, 64
        %v1542 = vpop.permute.xlu0 %1541
        %1543 = vrot.lane.b32.xlu0 %v791, 64
        %v1544 = vpop.permute.xlu0 %1543
        %1545 = vrot.lane.b32.xlu0 %v792, 64
        %v1546 = vpop.permute.xlu0 %1545
        %1579 = vmatprep.subr.mxu0 0.0
        %1580 = vmatpush1.msra.mxu0 %v1484
        %1581 = vmatprep.subr.mxu0 0.0
        %1582 = vmatpush1.msra.mxu0 %v1486
        %1583 = vmatprep.subr.mxu0 0.0
        %1584 = vmatpush1.msra.mxu0 %v1488
        %1585 = vmatprep.subr.mxu0 0.0
        %1586 = vmatpush1.msra.mxu0 %v1490
        %1587 = vmatprep.subr.mxu0 0.0
        %1588 = vmatpush1.msra.mxu0 %v1492
        %1589 = vmatprep.subr.mxu0 0.0
        %1590 = vmatpush1.msra.mxu0 %v1494
        %1591 = vmatprep.subr.mxu0 0.0
        %1592 = vmatpush1.msra.mxu0 %v1496
        %1593 = vmatprep.subr.mxu0 0.0
        %1594 = vmatpush1.msra.mxu0 %v1498
        %1595 = vmatprep.subr.mxu0 0.0
        %1596 = vmatpush1.msra.mxu0 %v1500
        %1597 = vmatprep.subr.mxu0 0.0
        %1598 = vmatpush1.msra.mxu0 %v1502
        %1599 = vmatprep.subr.mxu0 0.0
        %1600 = vmatpush1.msra.mxu0 %v1504
        %1601 = vmatprep.subr.mxu0 0.0
        %1602 = vmatpush1.msra.mxu0 %v1506
        %1603 = vmatprep.subr.mxu0 0.0
        %1604 = vmatpush1.msra.mxu0 %v1508
        %1605 = vmatprep.subr.mxu0 0.0
        %1606 = vmatpush1.msra.mxu0 %v1510
        %1607 = vmatprep.subr.mxu0 0.0
        %1608 = vmatpush1.msra.mxu0 %v1512
        %1609 = vmatprep.subr.mxu0 0.0
        %1610 = vmatpush1.msra.mxu0 %v1514
        %1611 = vmatprep.subr.mxu0 0.0
        %1612 = vmatpush1.msra.mxu0 %v1516
        %1613 = vmatprep.subr.mxu0 0.0
        %1614 = vmatpush1.msra.mxu0 %v1518
        %1615 = vmatprep.subr.mxu0 0.0
        %1616 = vmatpush1.msra.mxu0 %v1520
        %1617 = vmatprep.subr.mxu0 0.0
        %1618 = vmatpush1.msra.mxu0 %v1522
        %1619 = vmatprep.subr.mxu0 0.0
        %1620 = vmatpush1.msra.mxu0 %v1524
        %1621 = vmatprep.subr.mxu0 0.0
        %1622 = vmatpush1.msra.mxu0 %v1526
        %1623 = vmatprep.subr.mxu0 0.0
        %1624 = vmatpush1.msra.mxu0 %v1528
        %1625 = vmatprep.subr.mxu0 0.0
        %1626 = vmatpush1.msra.mxu0 %v1530
        %1627 = vmatprep.subr.mxu0 0.0
        %1628 = vmatpush1.msra.mxu0 %v1532
        %1629 = vmatprep.subr.mxu0 0.0
        %1630 = vmatpush1.msra.mxu0 %v1534
        %1631 = vmatprep.subr.mxu0 0.0
        %1632 = vmatpush1.msra.mxu0 %v1536
        %1633 = vmatprep.subr.mxu0 0.0
        %1634 = vmatpush1.msra.mxu0 %v1538
        %1635 = vmatprep.subr.mxu0 0.0
        %1636 = vmatpush1.msra.mxu0 %v1540
        %1637 = vmatprep.subr.mxu0 0.0
        %1638 = vmatpush1.msra.mxu0 %v1542
        %1639 = vmatprep.subr.mxu0 0.0
        %1640 = vmatpush1.msra.mxu0 %v1544
        %1641 = vmatprep.subr.mxu0 0.0
        %1642 = vmatpush1.msra.mxu0 %v1546
        %1643 = vmatprep.mubr.f32.mxu0 %v1436
        %1644 = vmatmul.mubr.f32.gmra.mrb[0].mxu0 %v1435
        %v1645 = vpop.f32.mrb[0].mxu0
        %v1646 = vadd.f32 0.0, %v1645
        %v1647 = vpop.f32.mrb[0].mxu0
        %1648 = vmatprep.mubr.f32.mxu0 %v1438
        %1649 = vmatmul.mubr.f32.gmra.mrb[0].mxu0 %v1437
        %v1650 = vpop.f32.mrb[0].mxu0
        %v1651 = vadd.f32 0.0, %v1650
        %v1652 = vpop.f32.mrb[0].mxu0
        %1653 = vmatprep.mubr.f32.mxu0 %v1440
        %1654 = vmatmul.mubr.f32.gmra.mrb[0].mxu0 %v1439
        %v1655 = vpop.f32.mrb[0].mxu0
        %v1656 = vadd.f32 0.0, %v1655
        %v1657 = vpop.f32.mrb[0].mxu0
        %1658 = vmatprep.mubr.f32.mxu0 %v1442
        %1659 = vmatmul.mubr.f32.gmra.mrb[0].mxu0 %v1441
        %v1660 = vpop.f32.mrb[0].mxu0
        %v1661 = vadd.f32 0.0, %v1660
        %v1662 = vpop.f32.mrb[0].mxu0
        %1663 = vmatprep.mubr.f32.mxu0 %v1444
        %1664 = vmatmul.mubr.f32.gmra.mrb[0].mxu0 %v1443
        %v1665 = vpop.f32.mrb[0].mxu0
        %v1666 = vadd.f32 0.0, %v1665
        %v1667 = vpop.f32.mrb[0].mxu0
        %1668 = vmatprep.mubr.f32.mxu0 %v1446
        %1669 = vmatmul.mubr.f32.gmra.mrb[0].mxu0 %v1445
        %v1670 = vpop.f32.mrb[0].mxu0
        %v1671 = vadd.f32 0.0, %v1670
        %v1672 = vpop.f32.mrb[0].mxu0
        %1673 = vmatprep.mubr.f32.mxu0 %v1448
        %1674 = vmatmul.mubr.f32.gmra.mrb[0].mxu0 %v1447
        %v1675 = vpop.f32.mrb[0].mxu0
        %v1676 = vadd.f32 0.0, %v1675
        %v1677 = vpop.f32.mrb[0].mxu0
        %1678 = vmatprep.mubr.f32.mxu0 %v1450
        %1679 = vmatmul.mubr.f32.gmra.mrb[0].mxu0 %v1449
        %v1680 = vpop.f32.mrb[0].mxu0
        %v1681 = vadd.f32 0.0, %v1680
        %v1682 = vpop.f32.mrb[0].mxu0
        %1683 = vdwg.mxu0
        %v1684 = vld [vmem:[%s2] sm:$0xff]
        %v1685 = vld [vmem:[%s2 + $0x8] sm:$0xff]
        %v1686 = vld [vmem:[%s2 + $0x10] sm:$0xff]
        %v1687 = vld [vmem:[%s2 + $0x18] sm:$0xff]
        %v1688 = vld [vmem:[%s4] sm:$0x1]
        %v1689 = vlaneseq
        %v1690 = vshrl.u32 %v1689, 7
        %v1691 = vsub.s32 0, %v1690
        %v1692 = vrot.slane %v1688, %v1691
        %v1694 = vsel %vm343, %v1646, 0
        %v1697 = vsel %vm343, %v1651, 0
        %v1700 = vsel %vm343, %v1656, 0
        %v1703 = vsel %vm343, %v1661, 0
        %v1706 = vsel %vm343, %v1666, 0
        %v1709 = vsel %vm343, %v1671, 0
        %v1712 = vsel %vm343, %v1676, 0
        %v1715 = vsel %vm343, %v1681, 0
        %1717 = vmatprep.subr.mxu0 0.0
        %1718 = vmatpush1.msra.mxu0 %v1684
        %1719 = vmatprep.subr.mxu0 0.0
        %1720 = vmatpush1.msra.mxu0 %v1685
        %1721 = vmatprep.subr.mxu0 0.0
        %1722 = vmatpush1.msra.mxu0 %v1686
        %1723 = vmatprep.subr.mxu0 0.0
        %1724 = vmatpush1.msra.mxu0 %v1687
        %1725 = vmatprep.subr.mxu0 0.0
        %1726 = vmatpush1.msra.mxu0 0.0
        %1727 = vmatprep.subr.mxu0 0.0
        %1728 = vmatpush1.msra.mxu0 0.0
        %1729 = vmatprep.subr.mxu0 0.0
        %1730 = vmatpush1.msra.mxu0 0.0
        %1731 = vmatprep.subr.mxu0 0.0
        %1732 = vmatpush1.msra.mxu0 0.0
        %1733 = vmatprep.subr.mxu0 0.0
        %1734 = vmatpush1.msra.mxu0 0.0
        %1735 = vmatprep.subr.mxu0 0.0
        %1736 = vmatpush1.msra.mxu0 0.0
        %1737 = vmatprep.subr.mxu0 0.0
        %1738 = vmatpush1.msra.mxu0 0.0
        %1739 = vmatprep.subr.mxu0 0.0
        %1740 = vmatpush1.msra.mxu0 0.0
        %1741 = vmatprep.subr.mxu0 0.0
        %1742 = vmatpush1.msra.mxu0 0.0
        %1743 = vmatprep.subr.mxu0 0.0
        %1744 = vmatpush1.msra.mxu0 0.0
        %1745 = vmatprep.subr.mxu0 0.0
        %1746 = vmatpush1.msra.mxu0 0.0
        %1747 = vmatprep.subr.mxu0 0.0
        %1748 = vmatpush1.msra.mxu0 0.0
        %1749 = vmatprep.subr.mxu0 0.0
        %1750 = vmatpush1.msra.mxu0 0.0
        %1751 = vmatprep.subr.mxu0 0.0
        %1752 = vmatpush1.msra.mxu0 0.0
        %1753 = vmatprep.subr.mxu0 0.0
        %1754 = vmatpush1.msra.mxu0 0.0
        %1755 = vmatprep.subr.mxu0 0.0
        %1756 = vmatpush1.msra.mxu0 0.0
        %1757 = vmatprep.subr.mxu0 0.0
        %1758 = vmatpush1.msra.mxu0 0.0
        %1759 = vmatprep.subr.mxu0 0.0
        %1760 = vmatpush1.msra.mxu0 0.0
        %1761 = vmatprep.subr.mxu0 0.0
        %1762 = vmatpush1.msra.mxu0 0.0
        %1763 = vmatprep.subr.mxu0 0.0
        %1764 = vmatpush1.msra.mxu0 0.0
        %1765 = vmatprep.subr.mxu0 0.0
        %1766 = vmatpush1.msra.mxu0 0.0
        %1767 = vmatprep.subr.mxu0 0.0
        %1768 = vmatpush1.msra.mxu0 0.0
        %1769 = vmatprep.subr.mxu0 0.0
        %1770 = vmatpush1.msra.mxu0 0.0
        %1771 = vmatprep.subr.mxu0 0.0
        %1772 = vmatpush1.msra.mxu0 0.0
        %1773 = vmatprep.subr.mxu0 0.0
        %1774 = vmatpush1.msra.mxu0 0.0
        %1775 = vmatprep.subr.mxu0 0.0
        %1776 = vmatpush1.msra.mxu0 0.0
        %1777 = vmatprep.subr.mxu0 0.0
        %1778 = vmatpush1.msra.mxu0 0.0
        %1779 = vmatprep.subr.mxu0 0.0
        %1780 = vmatpush1.msra.mxu0 0.0
        %1781 = vmatprep.mubr.f32.mxu0 0.0
        %1782 = vmatmul.mubr.f32.gmra.mrb[0].mxu0 %v1694
        %v1783 = vpop.f32.mrb[0].mxu0
        %v1784 = vadd.f32 %v1692, %v1783
        %v1785 = vpop.f32.mrb[0].mxu0
        %1786 = vmatprep.mubr.f32.mxu0 0.0
        %1787 = vmatmul.mubr.f32.gmra.mrb[0].mxu0 %v1697
        %v1788 = vpop.f32.mrb[0].mxu0
        %v1789 = vadd.f32 %v1692, %v1788
        %v1790 = vpop.f32.mrb[0].mxu0
        %1791 = vmatprep.mubr.f32.mxu0 0.0
        %1792 = vmatmul.mubr.f32.gmra.mrb[0].mxu0 %v1700
        %v1793 = vpop.f32.mrb[0].mxu0
        %v1794 = vadd.f32 %v1692, %v1793
        %v1795 = vpop.f32.mrb[0].mxu0
        %1796 = vmatprep.mubr.f32.mxu0 0.0
        %1797 = vmatmul.mubr.f32.gmra.mrb[0].mxu0 %v1703
        %v1798 = vpop.f32.mrb[0].mxu0
        %v1799 = vadd.f32 %v1692, %v1798
        %v1800 = vpop.f32.mrb[0].mxu0
        %1801 = vmatprep.mubr.f32.mxu0 0.0
        %1802 = vmatmul.mubr.f32.gmra.mrb[0].mxu0 %v1706
        %v1803 = vpop.f32.mrb[0].mxu0
        %v1804 = vadd.f32 %v1692, %v1803
        %v1805 = vpop.f32.mrb[0].mxu0
        %1806 = vmatprep.mubr.f32.mxu0 0.0
        %1807 = vmatmul.mubr.f32.gmra.mrb[0].mxu0 %v1709
        %v1808 = vpop.f32.mrb[0].mxu0
        %v1809 = vadd.f32 %v1692, %v1808
        %v1810 = vpop.f32.mrb[0].mxu0
        %1811 = vmatprep.mubr.f32.mxu0 0.0
        %1812 = vmatmul.mubr.f32.gmra.mrb[0].mxu0 %v1712
        %v1813 = vpop.f32.mrb[0].mxu0
        %v1814 = vadd.f32 %v1692, %v1813
        %v1815 = vpop.f32.mrb[0].mxu0
        %1816 = vmatprep.mubr.f32.mxu0 0.0
        %1817 = vmatmul.mubr.f32.gmra.mrb[0].mxu0 %v1715
        %v1818 = vpop.f32.mrb[0].mxu0
        %v1819 = vadd.f32 %v1692, %v1818
        %v1820 = vpop.f32.mrb[0].mxu0
        %1821 = vdwg.mxu0
        %v1822 = vsel %vm343, %v1784, 0.0
        %1823 = vadd.xlane.f32.xlu0 %v1822
        %v1824 = vpop.xlane.xlu0 %1823
        %v1825 = vsel %vm343, %v1789, 0.0
        %1826 = vadd.xlane.f32.xlu0 %v1825
        %v1827 = vpop.xlane.xlu0 %1826
        %v1828 = vsel %vm343, %v1794, 0.0
        %1829 = vadd.xlane.f32.xlu0 %v1828
        %v1830 = vpop.xlane.xlu0 %1829
        %v1831 = vsel %vm343, %v1799, 0.0
        %1832 = vadd.xlane.f32.xlu0 %v1831
        %v1833 = vpop.xlane.xlu0 %1832
        %v1834 = vsel %vm343, %v1804, 0.0
        %1835 = vadd.xlane.f32.xlu0 %v1834
        %v1836 = vpop.xlane.xlu0 %1835
        %v1837 = vsel %vm343, %v1809, 0.0
        %1838 = vadd.xlane.f32.xlu0 %v1837
        %v1839 = vpop.xlane.xlu0 %1838
        %v1840 = vsel %vm343, %v1814, 0.0
        %1841 = vadd.xlane.f32.xlu0 %v1840
        %v1842 = vpop.xlane.xlu0 %1841
        %v1843 = vsel %vm343, %v1819, 0.0
        %1844 = vadd.xlane.f32.xlu0 %v1843
        %v1845 = vpop.xlane.xlu0 %1844
        %v1846 = vrcp.pop 32.0
        %v1847 = vmul.f32 %v1824, %v1846
        %v1848 = vmul.f32 %v1827, %v1846
        %v1849 = vmul.f32 %v1830, %v1846
        %v1850 = vmul.f32 %v1833, %v1846
        %v1851 = vmul.f32 %v1836, %v1846
        %v1852 = vmul.f32 %v1839, %v1846
        %v1853 = vmul.f32 %v1842, %v1846
        %v1854 = vmul.f32 %v1845, %v1846
        %v1855 = vsub.f32 %v1784, %v1847
        %v1856 = vsub.f32 %v1789, %v1848
        %v1857 = vsub.f32 %v1794, %v1849
        %v1858 = vsub.f32 %v1799, %v1850
        %v1859 = vsub.f32 %v1804, %v1851
        %v1860 = vsub.f32 %v1809, %v1852
        %v1861 = vsub.f32 %v1814, %v1853
        %v1862 = vsub.f32 %v1819, %v1854
        %v1863 = vmul.f32 %v1855, %v1855
        %v1864 = vmul.f32 %v1856, %v1856
        %v1865 = vmul.f32 %v1857, %v1857
        %v1866 = vmul.f32 %v1858, %v1858
        %v1867 = vmul.f32 %v1859, %v1859
        %v1868 = vmul.f32 %v1860, %v1860
        %v1869 = vmul.f32 %v1861, %v1861
        %v1870 = vmul.f32 %v1862, %v1862
        %v1871 = vsel %vm343, %v1863, 0.0
        %1872 = vadd.xlane.f32.xlu0 %v1871
        %v1873 = vpop.xlane.xlu0 %1872
        %v1874 = vsel %vm343, %v1864, 0.0
        %1875 = vadd.xlane.f32.xlu0 %v1874
        %v1876 = vpop.xlane.xlu0 %1875
        %v1877 = vsel %vm343, %v1865, 0.0
        %1878 = vadd.xlane.f32.xlu0 %v1877
        %v1879 = vpop.xlane.xlu0 %1878
        %v1880 = vsel %vm343, %v1866, 0.0
        %1881 = vadd.xlane.f32.xlu0 %v1880
        %v1882 = vpop.xlane.xlu0 %1881
        %v1883 = vsel %vm343, %v1867, 0.0
        %1884 = vadd.xlane.f32.xlu0 %v1883
        %v1885 = vpop.xlane.xlu0 %1884
        %v1886 = vsel %vm343, %v1868, 0.0
        %1887 = vadd.xlane.f32.xlu0 %v1886
        %v1888 = vpop.xlane.xlu0 %1887
        %v1889 = vsel %vm343, %v1869, 0.0
        %1890 = vadd.xlane.f32.xlu0 %v1889
        %v1891 = vpop.xlane.xlu0 %1890
        %v1892 = vsel %vm343, %v1870, 0.0
        %1893 = vadd.xlane.f32.xlu0 %v1892
        %v1894 = vpop.xlane.xlu0 %1893
        %v1895 = vmul.f32 %v1873, %v1846
        %v1896 = vmul.f32 %v1876, %v1846
        %v1897 = vmul.f32 %v1879, %v1846
        %v1898 = vmul.f32 %v1882, %v1846
        %v1899 = vmul.f32 %v1885, %v1846
        %v1900 = vmul.f32 %v1888, %v1846
        %v1901 = vmul.f32 %v1891, %v1846
        %v1902 = vmul.f32 %v1894, %v1846
        %v1903 = vadd.f32 %v1895, 1e-05
        %v1904 = vadd.f32 %v1896, 1e-05
        %v1905 = vadd.f32 %v1897, 1e-05
        %v1906 = vadd.f32 %v1898, 1e-05
        %v1907 = vadd.f32 %v1899, 1e-05
        %v1908 = vadd.f32 %v1900, 1e-05
        %v1909 = vadd.f32 %v1901, 1e-05
        %v1910 = vadd.f32 %v1902, 1e-05
        %v1911 = vrsqrt.pop %v1903
        %v1912 = vrsqrt.pop %v1904
        %v1913 = vrsqrt.pop %v1905
        %v1914 = vrsqrt.pop %v1906
        %v1915 = vrsqrt.pop %v1907
        %v1916 = vrsqrt.pop %v1908
        %v1917 = vrsqrt.pop %v1909
        %v1918 = vrsqrt.pop %v1910
        %v1919 = vmul.f32 %v1855, %v1911
        %v1920 = vmul.f32 %v1856, %v1912
        %v1921 = vmul.f32 %v1857, %v1913
        %v1922 = vmul.f32 %v1858, %v1914
        %v1923 = vmul.f32 %v1859, %v1915
        %v1924 = vmul.f32 %v1860, %v1916
        %v1925 = vmul.f32 %v1861, %v1917
        %v1926 = vmul.f32 %v1862, %v1918
        %v1927 = vld [vmem:[%s4 + $0x1] sm:$0x1]
        %v1928 = vlaneseq
        %v1929 = vshrl.u32 %v1928, 7
        %v1930 = vsub.s32 0, %v1929
        %v1931 = vrot.slane %v1927, %v1930
        %v1932 = vmul.f32 %v1919, %v1931
        %v1933 = vmul.f32 %v1920, %v1931
        %v1934 = vmul.f32 %v1921, %v1931
        %v1935 = vmul.f32 %v1922, %v1931
        %v1936 = vmul.f32 %v1923, %v1931
        %v1937 = vmul.f32 %v1924, %v1931
        %v1938 = vmul.f32 %v1925, %v1931
        %v1939 = vmul.f32 %v1926, %v1931
        %v1940 = vld [vmem:[%s4 + $0x2] sm:$0x1]
        %v1941 = vlaneseq
        %v1942 = vshrl.u32 %v1941, 7
        %v1943 = vsub.s32 0, %v1942
        %v1944 = vrot.slane %v1940, %v1943
        %v1945 = vadd.f32 %v1932, %v1944
        %v1946 = vadd.f32 %v1933, %v1944
        %v1947 = vadd.f32 %v1934, %v1944
        %v1948 = vadd.f32 %v1935, %v1944
        %v1949 = vadd.f32 %v1936, %v1944
        %v1950 = vadd.f32 %v1937, %v1944
        %v1951 = vadd.f32 %v1938, %v1944
        %v1952 = vadd.f32 %v1939, %v1944
        %1953 = vst.msk [vmem:[%s322] sm:$0xff] %vm343, %v1945
        %1954 = vst.msk [vmem:[%s322 + $0x8] sm:$0xff] %vm343, %v1946
        %1955 = vst.msk [vmem:[%s322 + $0x10] sm:$0xff] %vm343, %v1947
        %1956 = vst.msk [vmem:[%s322 + $0x18] sm:$0xff] %vm343, %v1948
        %1957 = vst.msk [vmem:[%s322 + $0x20] sm:$0xff] %vm343, %v1949
        %1958 = vst.msk [vmem:[%s322 + $0x28] sm:$0xff] %vm343, %v1950
        %1959 = vst.msk [vmem:[%s322 + $0x30] sm:$0xff] %vm343, %v1951
        %1960 = vst.msk [vmem:[%s322 + $0x38] sm:$0xff] %vm343, %v1952
        %s1961 = smul.u32 8, %s20
        %p1962 = scmp.lt.s32.totalorder %s1961, 15
        %s1963 = scalar_select %p1962, %s1961, 15
        %s1964 = smul.addr %s1963, 8
        %s1965 = scalar_lea.vmem %s8, %s1964
        // Predicated region
        $region57: #{tpu_custom_call.1} parent=51 // pred_check
          %p1966 = pneg %p211
        $region58: #{tpu_custom_call.1} parent=51 // pred_check_branch
          %1968 = sbr.rel (%p1966) target = $region60
        $region59: #{tpu_custom_call.1} parent=51 // pred_region
          %s1969 = smul.u32 8, %s20
        $region60: #{tpu_custom_call.1} parent=51 // pred_fallthru
          _
      $region52: #{tpu_custom_call.1} parent=5 // pred_fallthru
        _
      %p1970 = scmp.le.s32.totalorder 2, %s15
      // Predicated region
      $region61: #{tpu_custom_call.1} parent=5 // pred_check
        %p1971 = pneg %p1970
      $region62: #{tpu_custom_call.1} parent=5 // pred_check_branch
        %1973 = sbr.rel (%p1971) target = $region64
      $region63: #{tpu_custom_call.1} parent=5 // pred_region
        %s1974 = ssub.s32 %s15, 2
        // Predicated region
        $region65: #{tpu_custom_call.1} parent=63 // pred_check
          %p1975 = pneg %p217
        $region66: #{tpu_custom_call.1} parent=63 // pred_check_branch
          %1977 = sbr.rel (%p1975) target = $region68
        $region67: #{tpu_custom_call.1} parent=63 // pred_region
          %s1978 = smul.u32 8, %s21
          %p1979 = scmp.lt.s32.totalorder %s1978, 15
          %s1980 = scalar_select %p1979, %s1978, 15
          %s1981 = smul.addr %s1980, 8
          %s1982 = scalar_lea.vmem %s8, %s1981
        $region68: #{tpu_custom_call.1} parent=63 // pred_fallthru
          _
      $region64: #{tpu_custom_call.1} parent=5 // pred_fallthru
        _
    $region6: #{tpu_custom_call.1} parent=1 // loop_footer
      %s19 = sadd.s32 1, %s15
    $region7: #{tpu_custom_call.1} parent=1 // loop_footer_branch
      %14 = sbr.rel target = $region3
    $region8: #{tpu_custom_call.1} parent=1 // loop_exit
      _
    %1983 = vsyncpa [#allocation3], 1
    %s1984 = scalar_lea.sflag [#allocation3], 1
    %1985 = vsyncpa %s1984, 1

</llo_original>
